<compile_context>
chip_gen: v6e
topology: v6e:2x2x1
jax: 0.10.0
libtpu: 0.0.40
codegen_flags: <defaults>
</compile_context>

<pallas_src>
import jax
import jax.numpy as jnp
from jax.experimental import pallas as pl
from jax.experimental.pallas import tpu as pltpu

# Layer sizes from the PyTorch module: 784 -> 256 -> 128 -> 64 -> 32 -> 16
DIMS = (784, 256, 128, 64, 32, 16)
K1_PADDED = 896  # 7 * 128: layer-1 contraction dim padded to a lane multiple


def _round_up(x, m):
    return ((x + m - 1) // m) * m


def _mlp_kernel(x_ref,
                w1_ref, b1_ref,
                w2_ref, b2_ref,
                w3_ref, b3_ref,
                w4_ref, b4_ref,
                w5_ref, b5_ref,
                o_ref):
    # bf16 operands feed the MXU; accumulation, bias add and ReLU are in f32.
    h = x_ref[...]  # (tb, 896) bf16, zero-padded columns beyond 784

    h = jnp.dot(h, w1_ref[...], preferred_element_type=jnp.float32) + b1_ref[...]
    h = jnp.maximum(h, 0.0).astype(jnp.bfloat16)

    h = jnp.dot(h, w2_ref[...], preferred_element_type=jnp.float32) + b2_ref[...]
    h = jnp.maximum(h, 0.0).astype(jnp.bfloat16)

    h = jnp.dot(h, w3_ref[...], preferred_element_type=jnp.float32) + b3_ref[...]
    h = jnp.maximum(h, 0.0).astype(jnp.bfloat16)

    h = jnp.dot(h, w4_ref[...], preferred_element_type=jnp.float32) + b4_ref[...]
    h = jnp.maximum(h, 0.0).astype(jnp.bfloat16)

    h = jnp.dot(h, w5_ref[...], preferred_element_type=jnp.float32) + b5_ref[...]

    o_ref[...] = h.astype(o_ref.dtype)


def mlp_forward(x, params, *, tb=None):
    """x: (B, 784) float32; params: list of (W_(in,out) f32, b_(1,out) f32)."""
    B, D_in = x.shape
    assert D_in == DIMS[0]
    D_out = DIMS[-1]

    if tb is None:
        # Up-to-512-row tiles, but keep >= 2 grid steps when possible so the
        # single "parallel" batch axis can be sharded across v7x's 2 TCs.
        tb = min(512, _round_up(pl.cdiv(B, 2), 8))
    # Clamp: multiple of 8, no larger than the (rounded-up) batch.
    tb = max(8, _round_up(min(tb, _round_up(B, 8)), 8))
    Bp = _round_up(B, tb)
    grid = Bp // tb

    # Pad batch to a tile multiple and the layer-1 contraction dim to 896,
    # cast to bf16 (halves x DMA bytes; MXU-native dtype).
    x_p = jnp.zeros((Bp, K1_PADDED), jnp.bfloat16)
    x_p = x_p.at[:B, :D_in].set(x.astype(jnp.bfloat16))

    flat_params = []
    w_specs = []
    for li, (w, b) in enumerate(params):
        w = w.astype(jnp.bfloat16)
        if li == 0:
            # zero rows for the padded part of the contraction dim
            w = jnp.pad(w, ((0, K1_PADDED - DIMS[0]), (0, 0)))
        b = b.astype(jnp.float32).reshape(1, -1)  # bias stays f32 (added post-acc)
        flat_params.append(w)
        flat_params.append(b)
        # Weights/biases are small -> full-array blocks, constant index map.
        w_specs.append(pl.BlockSpec(w.shape, lambda i: (0, 0)))
        w_specs.append(pl.BlockSpec(b.shape, lambda i: (0, 0)))

    flops = 2 * Bp * sum(DIMS[i] * DIMS[i + 1] for i in range(len(DIMS) - 1))
    bytes_accessed = (
        int(x_p.size) * x_p.dtype.itemsize
        + sum(int(a.size) * a.dtype.itemsize for a in flat_params)
        + Bp * D_out * 4
    )

    grid_spec = pltpu.PrefetchScalarGridSpec(
        num_scalar_prefetch=0,
        grid=(grid,),
        in_specs=[pl.BlockSpec((tb, K1_PADDED), lambda i: (i, 0))] + w_specs,
        out_specs=pl.BlockSpec((tb, D_out), lambda i: (i, 0)),
    )

    out = pl.pallas_call(
        _mlp_kernel,
        out_shape=jax.ShapeDtypeStruct((Bp, D_out), jnp.float32),
        grid_spec=grid_spec,
        compiler_params=pltpu.CompilerParams(
            dimension_semantics=("parallel",)),
        cost_estimate=pl.CostEstimate(
            flops=flops, transcendentals=0, bytes_accessed=bytes_accessed),
    )(x_p, *flat_params)

    return out[:B]


def init_params(key):
    """Deterministic init mimicking PyTorch nn.Linear default (uniform +-1/sqrt(fan_in)).
    Weights are stored as (in, out) — already transposed from PyTorch's (out, in)."""
    params = []
    for i in range(len(DIMS) - 1):
        d_in, d_out = DIMS[i], DIMS[i + 1]
        key, kw, kb = jax.random.split(key, 3)
        bound = 1.0 / jnp.sqrt(d_in)
        w = jax.random.uniform(kw, (d_in, d_out), jnp.float32, -bound, bound)
        b = jax.random.uniform(kb, (1, d_out), jnp.float32, -bound, bound)
        params.append((w, b))
    return params


def reference_forward_f32(x, params):
    h = x
    n = len(params)
    for i, (w, b) in enumerate(params):
        h = h @ w + b
        if i < n - 1:
            h = jnp.maximum(h, 0.0)
    return h


def reference_forward_bf16(x, params):
    """Emulates the kernel's numerics: bf16 operands, f32 accumulation."""
    h = x
    n = len(params)
    for i, (w, b) in enumerate(params):
        h = jnp.dot(h.astype(jnp.bfloat16), w.astype(jnp.bfloat16),
                    preferred_element_type=jnp.float32) + b
        if i < n - 1:
            h = jnp.maximum(h, 0.0)
    return h


if __name__ == "__main__":
    key = jax.random.PRNGKey(0)
    key, kx = jax.random.split(key)

    B = 16  # small batch for the demo; adaptive tb -> 2 grid steps of 8 rows
    x = jax.random.normal(kx, (B, DIMS[0]), jnp.float32)
    params = init_params(key)

    out = mlp_forward(x, params)
    out = jax.block_until_ready(out)

    ref_bf16 = reference_forward_bf16(x, params)  # same numerics as kernel
    ref_f32 = reference_forward_f32(x, params)    # full-precision semantics

    assert out.shape == (B, DIMS[-1]), out.shape
    assert jnp.allclose(out, ref_bf16, atol=2e-3, rtol=2e-3), \
        "mismatch vs bf16-emulated reference"
    assert jnp.allclose(out, ref_f32, atol=5e-2, rtol=5e-2), \
        "mismatch vs f32 reference"

    print("KERNEL_OK")
</pallas_src>

<mosaic_0001>
module attributes {stable_mosaic.version = 11 : i64} {
  func.func @_mlp_kernel(%arg0: i32, %arg1: memref<8x896xbf16, #tpu.memory_space<vmem>>, %arg2: memref<896x256xbf16, #tpu.memory_space<vmem>>, %arg3: memref<1x256xf32, #tpu.memory_space<vmem>>, %arg4: memref<256x128xbf16, #tpu.memory_space<vmem>>, %arg5: memref<1x128xf32, #tpu.memory_space<vmem>>, %arg6: memref<128x64xbf16, #tpu.memory_space<vmem>>, %arg7: memref<1x64xf32, #tpu.memory_space<vmem>>, %arg8: memref<64x32xbf16, #tpu.memory_space<vmem>>, %arg9: memref<1x32xf32, #tpu.memory_space<vmem>>, %arg10: memref<32x16xbf16, #tpu.memory_space<vmem>>, %arg11: memref<1x16xf32, #tpu.memory_space<vmem>>, %arg12: memref<8x16xf32, #tpu.memory_space<vmem>>) attributes {dimension_semantics = [#tpu.dimension_semantics<parallel>], iteration_bounds = array<i64: 2>, scalar_prefetch = 0 : i64, scratch_operands = 0 : i64, tpu.core_type = #tpu.core_type<tc>, window_params = [{transform_indices = @transform_0, window_bounds = array<i64: 8, 896>}, {pipeline_mode = #tpu.pipeline_mode<synchronous>, transform_indices = @transform_1, window_bounds = array<i64: 896, 256>}, {pipeline_mode = #tpu.pipeline_mode<synchronous>, transform_indices = @transform_2, window_bounds = array<i64: 1, 256>}, {pipeline_mode = #tpu.pipeline_mode<synchronous>, transform_indices = @transform_3, window_bounds = array<i64: 256, 128>}, {pipeline_mode = #tpu.pipeline_mode<synchronous>, transform_indices = @transform_4, window_bounds = array<i64: 1, 128>}, {pipeline_mode = #tpu.pipeline_mode<synchronous>, transform_indices = @transform_5, window_bounds = array<i64: 128, 64>}, {pipeline_mode = #tpu.pipeline_mode<synchronous>, transform_indices = @transform_6, window_bounds = array<i64: 1, 64>}, {pipeline_mode = #tpu.pipeline_mode<synchronous>, transform_indices = @transform_7, window_bounds = array<i64: 64, 32>}, {pipeline_mode = #tpu.pipeline_mode<synchronous>, transform_indices = @transform_8, window_bounds = array<i64: 1, 32>}, {pipeline_mode = #tpu.pipeline_mode<synchronous>, transform_indices = @transform_9, window_bounds = array<i64: 32, 16>}, {pipeline_mode = #tpu.pipeline_mode<synchronous>, transform_indices = @transform_10, window_bounds = array<i64: 1, 16>}, {transform_indices = @transform_11, window_bounds = array<i64: 8, 16>}]} {
    %c0 = arith.constant 0 : index
    %c0_0 = arith.constant 0 : index
    %0 = vector.load %arg1[%c0, %c0_0] : memref<8x896xbf16, #tpu.memory_space<vmem>>, vector<8x896xbf16>
    %c0_1 = arith.constant 0 : index
    %c0_2 = arith.constant 0 : index
    %1 = vector.load %arg2[%c0_1, %c0_2] : memref<896x256xbf16, #tpu.memory_space<vmem>>, vector<896x256xbf16>
    %cst = arith.constant dense<0.000000e+00> : vector<8x256xf32>
    %2 = tpu.matmul %0, %1, %cst {dimension_numbers = #tpu.dot_dimension_numbers<[1], [0], [0], [1], [0, 0, 1, 1], [], []>} : vector<8x896xbf16>, vector<896x256xbf16>, vector<8x256xf32> -> vector<8x256xf32>
    %c0_3 = arith.constant 0 : index
    %c0_4 = arith.constant 0 : index
    %3 = vector.load %arg3[%c0_3, %c0_4] : memref<1x256xf32, #tpu.memory_space<vmem>>, vector<1x256xf32>
    %4 = vector.broadcast %3 : vector<1x256xf32> to vector<8x256xf32>
    %5 = arith.addf %2, %4 : vector<8x256xf32>
    %cst_5 = arith.constant 0.000000e+00 : f32
    %6 = vector.broadcast %cst_5 : f32 to vector<8x256xf32>
    %7 = arith.maximumf %5, %6 : vector<8x256xf32>
    %8 = arith.truncf %7 : vector<8x256xf32> to vector<8x256xbf16>
    %c0_6 = arith.constant 0 : index
    %c0_7 = arith.constant 0 : index
    %9 = vector.load %arg4[%c0_6, %c0_7] : memref<256x128xbf16, #tpu.memory_space<vmem>>, vector<256x128xbf16>
    %cst_8 = arith.constant dense<0.000000e+00> : vector<8x128xf32>
    %10 = tpu.matmul %8, %9, %cst_8 {dimension_numbers = #tpu.dot_dimension_numbers<[1], [0], [0], [1], [0, 0, 1, 1], [], []>} : vector<8x256xbf16>, vector<256x128xbf16>, vector<8x128xf32> -> vector<8x128xf32>
    %c0_9 = arith.constant 0 : index
    %c0_10 = arith.constant 0 : index
    %11 = vector.load %arg5[%c0_9, %c0_10] : memref<1x128xf32, #tpu.memory_space<vmem>>, vector<1x128xf32>
    %12 = vector.broadcast %11 : vector<1x128xf32> to vector<8x128xf32>
    %13 = arith.addf %10, %12 : vector<8x128xf32>
    %cst_11 = arith.constant 0.000000e+00 : f32
    %14 = vector.broadcast %cst_11 : f32 to vector<8x128xf32>
    %15 = arith.maximumf %13, %14 : vector<8x128xf32>
    %16 = arith.truncf %15 : vector<8x128xf32> to vector<8x128xbf16>
    %c0_12 = arith.constant 0 : index
    %c0_13 = arith.constant 0 : index
    %17 = vector.load %arg6[%c0_12, %c0_13] : memref<128x64xbf16, #tpu.memory_space<vmem>>, vector<128x64xbf16>
    %cst_14 = arith.constant dense<0.000000e+00> : vector<8x64xf32>
    %18 = tpu.matmul %16, %17, %cst_14 {dimension_numbers = #tpu.dot_dimension_numbers<[1], [0], [0], [1], [0, 0, 1, 1], [], []>} : vector<8x128xbf16>, vector<128x64xbf16>, vector<8x64xf32> -> vector<8x64xf32>
    %c0_15 = arith.constant 0 : index
    %c0_16 = arith.constant 0 : index
    %19 = vector.load %arg7[%c0_15, %c0_16] : memref<1x64xf32, #tpu.memory_space<vmem>>, vector<1x64xf32>
    %20 = vector.broadcast %19 : vector<1x64xf32> to vector<8x64xf32>
    %21 = arith.addf %18, %20 : vector<8x64xf32>
    %cst_17 = arith.constant 0.000000e+00 : f32
    %22 = vector.broadcast %cst_17 : f32 to vector<8x64xf32>
    %23 = arith.maximumf %21, %22 : vector<8x64xf32>
    %24 = arith.truncf %23 : vector<8x64xf32> to vector<8x64xbf16>
    %c0_18 = arith.constant 0 : index
    %c0_19 = arith.constant 0 : index
    %25 = vector.load %arg8[%c0_18, %c0_19] : memref<64x32xbf16, #tpu.memory_space<vmem>>, vector<64x32xbf16>
    %cst_20 = arith.constant dense<0.000000e+00> : vector<8x32xf32>
    %26 = tpu.matmul %24, %25, %cst_20 {dimension_numbers = #tpu.dot_dimension_numbers<[1], [0], [0], [1], [0, 0, 1, 1], [], []>} : vector<8x64xbf16>, vector<64x32xbf16>, vector<8x32xf32> -> vector<8x32xf32>
    %c0_21 = arith.constant 0 : index
    %c0_22 = arith.constant 0 : index
    %27 = vector.load %arg9[%c0_21, %c0_22] : memref<1x32xf32, #tpu.memory_space<vmem>>, vector<1x32xf32>
    %28 = vector.broadcast %27 : vector<1x32xf32> to vector<8x32xf32>
    %29 = arith.addf %26, %28 : vector<8x32xf32>
    %cst_23 = arith.constant 0.000000e+00 : f32
    %30 = vector.broadcast %cst_23 : f32 to vector<8x32xf32>
    %31 = arith.maximumf %29, %30 : vector<8x32xf32>
    %32 = arith.truncf %31 : vector<8x32xf32> to vector<8x32xbf16>
    %c0_24 = arith.constant 0 : index
    %c0_25 = arith.constant 0 : index
    %33 = vector.load %arg10[%c0_24, %c0_25] : memref<32x16xbf16, #tpu.memory_space<vmem>>, vector<32x16xbf16>
    %cst_26 = arith.constant dense<0.000000e+00> : vector<8x16xf32>
    %34 = tpu.matmul %32, %33, %cst_26 {dimension_numbers = #tpu.dot_dimension_numbers<[1], [0], [0], [1], [0, 0, 1, 1], [], []>} : vector<8x32xbf16>, vector<32x16xbf16>, vector<8x16xf32> -> vector<8x16xf32>
    %c0_27 = arith.constant 0 : index
    %c0_28 = arith.constant 0 : index
    %35 = vector.load %arg11[%c0_27, %c0_28] : memref<1x16xf32, #tpu.memory_space<vmem>>, vector<1x16xf32>
    %36 = vector.broadcast %35 : vector<1x16xf32> to vector<8x16xf32>
    %37 = arith.addf %34, %36 : vector<8x16xf32>
    %c0_29 = arith.constant 0 : index
    %c0_30 = arith.constant 0 : index
    %38 = vector.load %arg12[%c0_29, %c0_30] : memref<8x16xf32, #tpu.memory_space<vmem>>, vector<8x16xf32>
    tpu.vector_store %arg12[%c0_29, %c0_30], %37 {strides = array<i32>} : memref<8x16xf32, #tpu.memory_space<vmem>>, vector<8x16xf32>,
    return
  }
  func.func @transform_0(%arg0: i32) -> (i32, i32) {
    %c0_i32 = arith.constant 0 : i32
    %c0_i32_0 = arith.constant 0 : i32
    return %arg0, %c0_i32 : i32, i32
  }
  func.func @transform_1(%arg0: i32) -> (i32, i32) {
    %c0_i32 = arith.constant 0 : i32
    %c0_i32_0 = arith.constant 0 : i32
    %c0_i32_1 = arith.constant 0 : i32
    return %c0_i32, %c0_i32_0 : i32, i32
  }
  func.func @transform_2(%arg0: i32) -> (i32, i32) {
    %c0_i32 = arith.constant 0 : i32
    %c0_i32_0 = arith.constant 0 : i32
    %c0_i32_1 = arith.constant 0 : i32
    return %c0_i32, %c0_i32_0 : i32, i32
  }
  func.func @transform_3(%arg0: i32) -> (i32, i32) {
    %c0_i32 = arith.constant 0 : i32
    %c0_i32_0 = arith.constant 0 : i32
    %c0_i32_1 = arith.constant 0 : i32
    return %c0_i32, %c0_i32_0 : i32, i32
  }
  func.func @transform_4(%arg0: i32) -> (i32, i32) {
    %c0_i32 = arith.constant 0 : i32
    %c0_i32_0 = arith.constant 0 : i32
    %c0_i32_1 = arith.constant 0 : i32
    return %c0_i32, %c0_i32_0 : i32, i32
  }
  func.func @transform_5(%arg0: i32) -> (i32, i32) {
    %c0_i32 = arith.constant 0 : i32
    %c0_i32_0 = arith.constant 0 : i32
    %c0_i32_1 = arith.constant 0 : i32
    return %c0_i32, %c0_i32_0 : i32, i32
  }
  func.func @transform_6(%arg0: i32) -> (i32, i32) {
    %c0_i32 = arith.constant 0 : i32
    %c0_i32_0 = arith.constant 0 : i32
    %c0_i32_1 = arith.constant 0 : i32
    return %c0_i32, %c0_i32_0 : i32, i32
  }
  func.func @transform_7(%arg0: i32) -> (i32, i32) {
    %c0_i32 = arith.constant 0 : i32
    %c0_i32_0 = arith.constant 0 : i32
    %c0_i32_1 = arith.constant 0 : i32
    return %c0_i32, %c0_i32_0 : i32, i32
  }
  func.func @transform_8(%arg0: i32) -> (i32, i32) {
    %c0_i32 = arith.constant 0 : i32
    %c0_i32_0 = arith.constant 0 : i32
    %c0_i32_1 = arith.constant 0 : i32
    return %c0_i32, %c0_i32_0 : i32, i32
  }
  func.func @transform_9(%arg0: i32) -> (i32, i32) {
    %c0_i32 = arith.constant 0 : i32
    %c0_i32_0 = arith.constant 0 : i32
    %c0_i32_1 = arith.constant 0 : i32
    return %c0_i32, %c0_i32_0 : i32, i32
  }
  func.func @transform_10(%arg0: i32) -> (i32, i32) {
    %c0_i32 = arith.constant 0 : i32
    %c0_i32_0 = arith.constant 0 : i32
    %c0_i32_1 = arith.constant 0 : i32
    return %c0_i32, %c0_i32_0 : i32, i32
  }
  func.func @transform_11(%arg0: i32) -> (i32, i32) {
    %c0_i32 = arith.constant 0 : i32
    %c0_i32_0 = arith.constant 0 : i32
    return %arg0, %c0_i32 : i32, i32
  }
}

</mosaic_0001>

<llo_original>
// kernel: tpu_custom_call.1
$region0: #{tpu_custom_call.1}
  #allocation0 [shape = 'u32[]', space=smem, size = 0x4, offset = 0x4, fixed_abs, tag = 'smem constant byte address 0x4 - core index']
  #allocation1 [shape = 'u32[144,128]{1,0:T(1,128)}', space=vmem, size = 0x12000, scoped, tag = 'internal scratch']
  %s0 = inlined_call_operand.hbm [shape: bf16[16,896], index: 0, kind: input, shape index: {}]
  %s1 = inlined_call_operand.hbm [shape: bf16[896,256], index: 1, kind: input, shape index: {}]
  %s2 = inlined_call_operand.hbm [shape: f32[1,256], index: 2, kind: input, shape index: {}]
  %s3 = inlined_call_operand.vmem [shape: bf16[256,128], index: 3, kind: input, shape index: {}]
  %s4 = inlined_call_operand.hbm [shape: f32[1,128], index: 4, kind: input, shape index: {}]
  %s5 = inlined_call_operand.vmem [shape: bf16[128,64], index: 5, kind: input, shape index: {}]
  %s6 = inlined_call_operand.hbm [shape: f32[1,64], index: 6, kind: input, shape index: {}]
  %s7 = inlined_call_operand.vmem [shape: bf16[64,32], index: 7, kind: input, shape index: {}]
  %s8 = inlined_call_operand.hbm [shape: f32[1,32], index: 8, kind: input, shape index: {}]
  %s9 = inlined_call_operand.vmem [shape: bf16[32,16], index: 9, kind: input, shape index: {}]
  %s10 = inlined_call_operand.vmem [shape: f32[1,16], index: 10, kind: input, shape index: {}]
  %s11 = inlined_call_operand.hbm [shape: f32[16,16], index: 11, kind: output, shape index: {}]
  %s12 = sld [smem:[#allocation0]]
  $region101: #{tpu_custom_call.1} parent=0
    _
  %s14 = ssub.s32 1, %s12
  %s15 = scalar_select 0, %s14, %s12
  $region1: #{tpu_custom_call.1} parent=0
    #allocation2 [shape = 'u8[28672]{0}', space=vmem, size = 0x7000, scoped, tag = 'input window, operand 0']
    #allocation3 [shape = 's32[2]{0}', space=sflag, size = 0x8, scoped, tag = 'scoped memory for tpu_custom_call.1']
    #allocation4 [shape = 's32[2]{0}', space=sflag, size = 0x8, scoped, tag = 'scoped memory for tpu_custom_call.1']
    #allocation5 [shape = 'u8[458752]{0}', space=vmem, size = 0x70000, scoped, tag = 'input window, operand 1, single buffered']
    #allocation6 [shape = 's32[1]{0}', space=sflag, size = 0x4, scoped, tag = 'scoped memory for tpu_custom_call.1']
    #allocation7 [shape = 'u8[1024]{0}', space=vmem, size = 0x400, scoped, tag = 'input window, operand 2, single buffered']
    #allocation8 [shape = 'u8[512]{0}', space=vmem, size = 0x400, scoped, tag = 'input window, operand 4, single buffered']
    #allocation9 [shape = 's32[1]{0}', space=sflag, size = 0x4, scoped, tag = 'scoped memory for tpu_custom_call.1']
    #allocation10 [shape = 'u8[512]{0}', space=vmem, size = 0x400, scoped, tag = 'input window, operand 6, single buffered']
    #allocation11 [shape = 'u8[512]{0}', space=vmem, size = 0x400, scoped, tag = 'input window, operand 8, single buffered']
    #allocation12 [shape = 's32[1]{0}', space=sflag, size = 0x4, scoped, tag = 'scoped memory for tpu_custom_call.1']
    #allocation13 [shape = 'u8[8192]{0}', space=vmem, size = 0x2000, scoped, tag = 'output window, operand 0']
    %16 = vsyncpa [#allocation3], 0
    %s17 = scalar_lea.sflag [#allocation3], 1
    %18 = vsyncpa %s17, 0
    %19 = vsyncpa [#allocation6], 0
    %20 = vsyncpa [#allocation9], 0
    %21 = vsyncpa [#allocation12], 0
    %22 = vsyncpa [#allocation4], 0
    %s23 = scalar_lea.sflag [#allocation4], 1
    %24 = vsyncpa %s23, 0
    loop: start=0, step=1, limit=4
    $region2: #{tpu_custom_call.1} parent=1 // loop_pre_header
      _
    $region3: #{tpu_custom_call.1} parent=1 // loop_header
      %s26 = sphi 0, %s30
      %p27 = scmp.ge.s32.totalorder %s26, 4
      %s36 = sphi 0, %s38
      %s39 = sphi 0, %s36
      %s40 = sphi 0, %s39
      %s56 = sphi 0, %s40
      %s60 = sphi 0, %s60
      %s62 = sphi 0, %s60
      %s63 = sphi 0, %s62
      %s77 = sphi 0, %s63
      %s81 = sphi 0, %s81
      %s83 = sphi 0, %s81
      %s84 = sphi 0, %s83
      %s98 = sphi 0, %s84
      %s102 = sphi 0, %s102
      %s104 = sphi 0, %s102
      %s105 = sphi 0, %s104
      %s119 = sphi 0, %s105
      %s123 = sphi 0, %s123
      %s125 = sphi 0, %s123
      %s126 = sphi 0, %s125
      %s140 = sphi 0, %s126
      %s144 = sphi 0, %s144
      %s146 = sphi 0, %s144
      %s147 = sphi 0, %s146
      %s161 = sphi 0, %s147
      %s165 = sphi 0, %s165
      %s167 = sphi 0, %s165
      %s168 = sphi 0, %s167
      %s182 = sphi 0, %s168
      %s186 = sphi 0, %s186
      %s188 = sphi 0, %s186
      %s189 = sphi 0, %s188
      %s203 = sphi 0, %s189
      %s207 = sphi 0, %s207
      %s209 = sphi 0, %s207
      %s210 = sphi 0, %s209
      %s224 = sphi 0, %s210
      %s228 = sphi 0, %s228
      %s230 = sphi 0, %s228
      %s231 = sphi 0, %s230
      %s245 = sphi 0, %s231
      %s249 = sphi 0, %s249
      %s251 = sphi 0, %s249
      %s252 = sphi 0, %s251
      %s266 = sphi 0, %s252
      %s272 = sphi 0, %s274
      %s275 = sphi 0, %s272
      %s276 = sphi 0, %s275
      %s292 = sphi 0, %s276
    $region4: #{tpu_custom_call.1} parent=1 // loop_header_branch
      %29 = sbr.rel (%p27) target = $region8
    $region5: #{tpu_custom_call.1} parent=1 // loop_body
      %s31 = ssub.s32 %s26, 1
      %s32 = ssub.s32 %s26, 2
      %s33 = sadd.s32 %s26, 1
      %s34 = ssub.s32 %s26, %s33
      %p35 = scmp.eq.s32.totalorder %s34, 0
      %s37 = sadd.s32 %s36, 1
      %s38 = scalar_select %p35, %s36, %s37
      %p41 = pneg %p35
      %p42 = scmp.eq.s32.totalorder %s26, 1
      %p43 = por %p41, %p42
      %p44 = scmp.ne.s32.totalorder %s36, %s39
      %p45 = scmp.eq.s32.totalorder %s26, 0
      %p46 = por %p44, %p45
      %p47 = scmp.ne.s32.totalorder %s36, %s39
      %p48 = scmp.eq.s32.totalorder %s31, 1
      %p49 = por %p47, %p48
      %p50 = scmp.ne.s32.totalorder %s39, %s40
      %p51 = scmp.eq.s32.totalorder %s31, 0
      %p52 = por %p50, %p51
      %p53 = scmp.ne.s32.totalorder %s39, %s40
      %p54 = scmp.eq.s32.totalorder %s32, 1
      %p55 = por %p53, %p54
      %p57 = scmp.ne.s32.totalorder %s40, %s56
      %p58 = scmp.eq.s32.totalorder %s32, 0
      %p59 = por %p57, %p58
      %s61 = sadd.s32 %s60, 1
      %p64 = scmp.eq.s32.totalorder %s26, 1
      %p65 = scmp.ne.s32.totalorder %s60, %s62
      %p66 = scmp.eq.s32.totalorder %s26, 0
      %p67 = por %p65, %p66
      %p68 = scmp.ne.s32.totalorder %s60, %s62
      %p69 = scmp.eq.s32.totalorder %s31, 1
      %p70 = por %p68, %p69
      %p71 = scmp.ne.s32.totalorder %s62, %s63
      %p72 = scmp.eq.s32.totalorder %s31, 0
      %p73 = por %p71, %p72
      %p74 = scmp.ne.s32.totalorder %s62, %s63
      %p75 = scmp.eq.s32.totalorder %s32, 1
      %p76 = por %p74, %p75
      %p78 = scmp.ne.s32.totalorder %s63, %s77
      %p79 = scmp.eq.s32.totalorder %s32, 0
      %p80 = por %p78, %p79
      %s82 = sadd.s32 %s81, 1
      %p85 = scmp.eq.s32.totalorder %s26, 1
      %p86 = scmp.ne.s32.totalorder %s81, %s83
      %p87 = scmp.eq.s32.totalorder %s26, 0
      %p88 = por %p86, %p87
      %p89 = scmp.ne.s32.totalorder %s81, %s83
      %p90 = scmp.eq.s32.totalorder %s31, 1
      %p91 = por %p89, %p90
      %p92 = scmp.ne.s32.totalorder %s83, %s84
      %p93 = scmp.eq.s32.totalorder %s31, 0
      %p94 = por %p92, %p93
      %p95 = scmp.ne.s32.totalorder %s83, %s84
      %p96 = scmp.eq.s32.totalorder %s32, 1
      %p97 = por %p95, %p96
      %p99 = scmp.ne.s32.totalorder %s84, %s98
      %p100 = scmp.eq.s32.totalorder %s32, 0
      %p101 = por %p99, %p100
      %s103 = sadd.s32 %s102, 1
      %p106 = scmp.eq.s32.totalorder %s26, 1
      %p107 = scmp.ne.s32.totalorder %s102, %s104
      %p108 = scmp.eq.s32.totalorder %s26, 0
      %p109 = por %p107, %p108
      %p110 = scmp.ne.s32.totalorder %s102, %s104
      %p111 = scmp.eq.s32.totalorder %s31, 1
      %p112 = por %p110, %p111
      %p113 = scmp.ne.s32.totalorder %s104, %s105
      %p114 = scmp.eq.s32.totalorder %s31, 0
      %p115 = por %p113, %p114
      %p116 = scmp.ne.s32.totalorder %s104, %s105
      %p117 = scmp.eq.s32.totalorder %s32, 1
      %p118 = por %p116, %p117
      %p120 = scmp.ne.s32.totalorder %s105, %s119
      %p121 = scmp.eq.s32.totalorder %s32, 0
      %p122 = por %p120, %p121
      %s124 = sadd.s32 %s123, 1
      %p127 = scmp.eq.s32.totalorder %s26, 1
      %p128 = scmp.ne.s32.totalorder %s123, %s125
      %p129 = scmp.eq.s32.totalorder %s26, 0
      %p130 = por %p128, %p129
      %p131 = scmp.ne.s32.totalorder %s123, %s125
      %p132 = scmp.eq.s32.totalorder %s31, 1
      %p133 = por %p131, %p132
      %p134 = scmp.ne.s32.totalorder %s125, %s126
      %p135 = scmp.eq.s32.totalorder %s31, 0
      %p136 = por %p134, %p135
      %p137 = scmp.ne.s32.totalorder %s125, %s126
      %p138 = scmp.eq.s32.totalorder %s32, 1
      %p139 = por %p137, %p138
      %p141 = scmp.ne.s32.totalorder %s126, %s140
      %p142 = scmp.eq.s32.totalorder %s32, 0
      %p143 = por %p141, %p142
      %s145 = sadd.s32 %s144, 1
      %p148 = scmp.eq.s32.totalorder %s26, 1
      %p149 = scmp.ne.s32.totalorder %s144, %s146
      %p150 = scmp.eq.s32.totalorder %s26, 0
      %p151 = por %p149, %p150
      %p152 = scmp.ne.s32.totalorder %s144, %s146
      %p153 = scmp.eq.s32.totalorder %s31, 1
      %p154 = por %p152, %p153
      %p155 = scmp.ne.s32.totalorder %s146, %s147
      %p156 = scmp.eq.s32.totalorder %s31, 0
      %p157 = por %p155, %p156
      %p158 = scmp.ne.s32.totalorder %s146, %s147
      %p159 = scmp.eq.s32.totalorder %s32, 1
      %p160 = por %p158, %p159
      %p162 = scmp.ne.s32.totalorder %s147, %s161
      %p163 = scmp.eq.s32.totalorder %s32, 0
      %p164 = por %p162, %p163
      %s166 = sadd.s32 %s165, 1
      %p169 = scmp.eq.s32.totalorder %s26, 1
      %p170 = scmp.ne.s32.totalorder %s165, %s167
      %p171 = scmp.eq.s32.totalorder %s26, 0
      %p172 = por %p170, %p171
      %p173 = scmp.ne.s32.totalorder %s165, %s167
      %p174 = scmp.eq.s32.totalorder %s31, 1
      %p175 = por %p173, %p174
      %p176 = scmp.ne.s32.totalorder %s167, %s168
      %p177 = scmp.eq.s32.totalorder %s31, 0
      %p178 = por %p176, %p177
      %p179 = scmp.ne.s32.totalorder %s167, %s168
      %p180 = scmp.eq.s32.totalorder %s32, 1
      %p181 = por %p179, %p180
      %p183 = scmp.ne.s32.totalorder %s168, %s182
      %p184 = scmp.eq.s32.totalorder %s32, 0
      %p185 = por %p183, %p184
      %s187 = sadd.s32 %s186, 1
      %p190 = scmp.eq.s32.totalorder %s26, 1
      %p191 = scmp.ne.s32.totalorder %s186, %s188
      %p192 = scmp.eq.s32.totalorder %s26, 0
      %p193 = por %p191, %p192
      %p194 = scmp.ne.s32.totalorder %s186, %s188
      %p195 = scmp.eq.s32.totalorder %s31, 1
      %p196 = por %p194, %p195
      %p197 = scmp.ne.s32.totalorder %s188, %s189
      %p198 = scmp.eq.s32.totalorder %s31, 0
      %p199 = por %p197, %p198
      %p200 = scmp.ne.s32.totalorder %s188, %s189
      %p201 = scmp.eq.s32.totalorder %s32, 1
      %p202 = por %p200, %p201
      %p204 = scmp.ne.s32.totalorder %s189, %s203
      %p205 = scmp.eq.s32.totalorder %s32, 0
      %p206 = por %p204, %p205
      %s208 = sadd.s32 %s207, 1
      %p211 = scmp.eq.s32.totalorder %s26, 1
      %p212 = scmp.ne.s32.totalorder %s207, %s209
      %p213 = scmp.eq.s32.totalorder %s26, 0
      %p214 = por %p212, %p213
      %p215 = scmp.ne.s32.totalorder %s207, %s209
      %p216 = scmp.eq.s32.totalorder %s31, 1
      %p217 = por %p215, %p216
      %p218 = scmp.ne.s32.totalorder %s209, %s210
      %p219 = scmp.eq.s32.totalorder %s31, 0
      %p220 = por %p218, %p219
      %p221 = scmp.ne.s32.totalorder %s209, %s210
      %p222 = scmp.eq.s32.totalorder %s32, 1
      %p223 = por %p221, %p222
      %p225 = scmp.ne.s32.totalorder %s210, %s224
      %p226 = scmp.eq.s32.totalorder %s32, 0
      %p227 = por %p225, %p226
      %s229 = sadd.s32 %s228, 1
      %p232 = scmp.eq.s32.totalorder %s26, 1
      %p233 = scmp.ne.s32.totalorder %s228, %s230
      %p234 = scmp.eq.s32.totalorder %s26, 0
      %p235 = por %p233, %p234
      %p236 = scmp.ne.s32.totalorder %s228, %s230
      %p237 = scmp.eq.s32.totalorder %s31, 1
      %p238 = por %p236, %p237
      %p239 = scmp.ne.s32.totalorder %s230, %s231
      %p240 = scmp.eq.s32.totalorder %s31, 0
      %p241 = por %p239, %p240
      %p242 = scmp.ne.s32.totalorder %s230, %s231
      %p243 = scmp.eq.s32.totalorder %s32, 1
      %p244 = por %p242, %p243
      %p246 = scmp.ne.s32.totalorder %s231, %s245
      %p247 = scmp.eq.s32.totalorder %s32, 0
      %p248 = por %p246, %p247
      %s250 = sadd.s32 %s249, 1
      %p253 = scmp.eq.s32.totalorder %s26, 1
      %p254 = scmp.ne.s32.totalorder %s249, %s251
      %p255 = scmp.eq.s32.totalorder %s26, 0
      %p256 = por %p254, %p255
      %p257 = scmp.ne.s32.totalorder %s249, %s251
      %p258 = scmp.eq.s32.totalorder %s31, 1
      %p259 = por %p257, %p258
      %p260 = scmp.ne.s32.totalorder %s251, %s252
      %p261 = scmp.eq.s32.totalorder %s31, 0
      %p262 = por %p260, %p261
      %p263 = scmp.ne.s32.totalorder %s251, %s252
      %p264 = scmp.eq.s32.totalorder %s32, 1
      %p265 = por %p263, %p264
      %p267 = scmp.ne.s32.totalorder %s252, %s266
      %p268 = scmp.eq.s32.totalorder %s32, 0
      %p269 = por %p267, %p268
      %s270 = ssub.s32 %s26, %s33
      %p271 = scmp.eq.s32.totalorder %s270, 0
      %s273 = sadd.s32 %s272, 1
      %s274 = scalar_select %p271, %s272, %s273
      %p277 = pneg %p271
      %p278 = scmp.eq.s32.totalorder %s26, 1
      %p279 = por %p277, %p278
      %p280 = scmp.ne.s32.totalorder %s272, %s275
      %p281 = scmp.eq.s32.totalorder %s26, 0
      %p282 = por %p280, %p281
      %p283 = scmp.ne.s32.totalorder %s272, %s275
      %p284 = scmp.eq.s32.totalorder %s31, 1
      %p285 = por %p283, %p284
      %p286 = scmp.ne.s32.totalorder %s275, %s276
      %p287 = scmp.eq.s32.totalorder %s31, 0
      %p288 = por %p286, %p287
      %p289 = scmp.ne.s32.totalorder %s275, %s276
      %p290 = scmp.eq.s32.totalorder %s32, 1
      %p291 = por %p289, %p290
      %p293 = scmp.ne.s32.totalorder %s276, %s292
      %p294 = scmp.eq.s32.totalorder %s32, 0
      %p295 = por %p293, %p294
      %p296 = scmp.le.s32.totalorder 1, %s26
      %p297 = scmp.lt.s32.totalorder %s26, 3
      %p298 = pnand %p296, %p297
      %p299 = pneg %p298
      // Predicated region
      $region9: #{tpu_custom_call.1} parent=5 // pred_check
        _
      $region10: #{tpu_custom_call.1} parent=5 // pred_check_branch
        %301 = sbr.rel (%p298) target = $region12
      $region11: #{tpu_custom_call.1} parent=5 // pred_region
        %s302 = ssub.s32 %s26, 1
        // Predicated region
        $region13: #{tpu_custom_call.1} parent=11 // pred_check
          %p303 = pneg %p73
        $region14: #{tpu_custom_call.1} parent=11 // pred_check_branch
          %305 = sbr.rel (%p303) target = $region16
        $region15: #{tpu_custom_call.1} parent=11 // pred_region
          %s307 = ssub.s32 14336, 14336
          %308 = vsyncadd [#allocation6], %s307
          %s309 = sshll.u32 [#allocation5], 4
          %s310 = int_to_ptr.vmem [resolvable:$true] %s309
          %315 = dma.hbm_to_vmem [thread:$0]  %s1, 14336, %s310, [#allocation6], 128, 128, 8
        $region16: #{tpu_custom_call.1} parent=11 // pred_fallthru
          _
        // Predicated region
        $region17: #{tpu_custom_call.1} parent=11 // pred_check
          %p316 = pneg %p94
        $region18: #{tpu_custom_call.1} parent=11 // pred_check_branch
          %318 = sbr.rel (%p316) target = $region20
        $region19: #{tpu_custom_call.1} parent=11 // pred_region
          %s320 = ssub.s32 32, 32
          %321 = vsyncadd [#allocation6], %s320
          %s323 = sshll.u32 [#allocation7], 4
          %s324 = int_to_ptr.vmem [resolvable:$true] %s323
          %326 = dma.hbm_to_vmem [thread:$0]  %s2, 32, %s324, [#allocation6]
        $region20: #{tpu_custom_call.1} parent=11 // pred_fallthru
          _
        // Predicated region
        $region21: #{tpu_custom_call.1} parent=11 // pred_check
          %p327 = pneg %p115
        $region22: #{tpu_custom_call.1} parent=11 // pred_check_branch
          %329 = sbr.rel (%p327) target = $region24
        $region23: #{tpu_custom_call.1} parent=11 // pred_region
          _
        $region24: #{tpu_custom_call.1} parent=11 // pred_fallthru
          _
        // Predicated region
        $region25: #{tpu_custom_call.1} parent=11 // pred_check
          %p330 = pneg %p136
        $region26: #{tpu_custom_call.1} parent=11 // pred_check_branch
          %332 = sbr.rel (%p330) target = $region28
        $region27: #{tpu_custom_call.1} parent=11 // pred_region
          %s334 = ssub.s32 16, 16
          %335 = vsyncadd [#allocation9], %s334
          %s337 = sshll.u32 [#allocation8], 4
          %s338 = int_to_ptr.vmem [resolvable:$true] %s337
          %340 = dma.hbm_to_vmem [thread:$0]  %s4, 16, %s338, [#allocation9]
        $region28: #{tpu_custom_call.1} parent=11 // pred_fallthru
          _
        // Predicated region
        $region29: #{tpu_custom_call.1} parent=11 // pred_check
          %p341 = pneg %p157
        $region30: #{tpu_custom_call.1} parent=11 // pred_check_branch
          %343 = sbr.rel (%p341) target = $region32
        $region31: #{tpu_custom_call.1} parent=11 // pred_region
          _
        $region32: #{tpu_custom_call.1} parent=11 // pred_fallthru
          _
        // Predicated region
        $region33: #{tpu_custom_call.1} parent=11 // pred_check
          %p344 = pneg %p178
        $region34: #{tpu_custom_call.1} parent=11 // pred_check_branch
          %346 = sbr.rel (%p344) target = $region36
        $region35: #{tpu_custom_call.1} parent=11 // pred_region
          %s348 = ssub.s32 16, 16
          %349 = vsyncadd [#allocation9], %s348
          %s351 = sshll.u32 [#allocation10], 4
          %s352 = int_to_ptr.vmem [resolvable:$true] %s351
          %354 = dma.hbm_to_vmem [thread:$0]  %s6, 16, %s352, [#allocation9]
        $region36: #{tpu_custom_call.1} parent=11 // pred_fallthru
          _
        // Predicated region
        $region37: #{tpu_custom_call.1} parent=11 // pred_check
          %p355 = pneg %p199
        $region38: #{tpu_custom_call.1} parent=11 // pred_check_branch
          %357 = sbr.rel (%p355) target = $region40
        $region39: #{tpu_custom_call.1} parent=11 // pred_region
          _
        $region40: #{tpu_custom_call.1} parent=11 // pred_fallthru
          _
        // Predicated region
        $region41: #{tpu_custom_call.1} parent=11 // pred_check
          %p358 = pneg %p220
        $region42: #{tpu_custom_call.1} parent=11 // pred_check_branch
          %360 = sbr.rel (%p358) target = $region44
        $region43: #{tpu_custom_call.1} parent=11 // pred_region
          %s362 = ssub.s32 16, 16
          %363 = vsyncadd [#allocation12], %s362
          %s365 = sshll.u32 [#allocation11], 4
          %s366 = int_to_ptr.vmem [resolvable:$true] %s365
          %368 = dma.hbm_to_vmem [thread:$0]  %s8, 16, %s366, [#allocation12]
        $region44: #{tpu_custom_call.1} parent=11 // pred_fallthru
          _
        // Predicated region
        $region45: #{tpu_custom_call.1} parent=11 // pred_check
          %p369 = pneg %p241
        $region46: #{tpu_custom_call.1} parent=11 // pred_check_branch
          %371 = sbr.rel (%p369) target = $region48
        $region47: #{tpu_custom_call.1} parent=11 // pred_region
          _
        $region48: #{tpu_custom_call.1} parent=11 // pred_fallthru
          _
        // Predicated region
        $region49: #{tpu_custom_call.1} parent=11 // pred_check
          %p372 = pneg %p262
        $region50: #{tpu_custom_call.1} parent=11 // pred_check_branch
          %374 = sbr.rel (%p372) target = $region52
        $region51: #{tpu_custom_call.1} parent=11 // pred_region
          _
        $region52: #{tpu_custom_call.1} parent=11 // pred_fallthru
          _
      $region12: #{tpu_custom_call.1} parent=5 // pred_fallthru
        _
      %p375 = scmp.lt.s32.totalorder %s26, 2
      // Predicated region
      $region53: #{tpu_custom_call.1} parent=5 // pred_check
        %p376 = pneg %p375
      $region54: #{tpu_custom_call.1} parent=5 // pred_check_branch
        %378 = sbr.rel (%p376) target = $region56
      $region55: #{tpu_custom_call.1} parent=5 // pred_region
        // Predicated region
        $region57: #{tpu_custom_call.1} parent=55 // pred_check
          %p379 = pneg %p46
        $region58: #{tpu_custom_call.1} parent=55 // pred_check_branch
          %381 = sbr.rel (%p379) target = $region60
        $region59: #{tpu_custom_call.1} parent=55 // pred_region
          %s382 = sand.u32 %s36, 1
          %s383 = scalar_lea.sflag [#allocation3], %s382
          %s384 = sand.u32 %s36, 1
          %s385 = smul.addr %s384, 28
          %s386 = scalar_lea.vmem [#allocation2], %s385
          %s388 = ssub.s32 448, 448
          %389 = vsyncadd %s383, %s388
          %s390 = smul.addr %s26, 7
          %s391 = smul.addr %s390, 64
          %s392 = scalar_lea.hbm %s0, %s391
          %s394 = sshll.u32 %s386, 4
          %s395 = int_to_ptr.vmem [resolvable:$true] %s394
          %397 = dma.hbm_to_vmem [thread:$0]  %s392, 448, %s395, %s383
        $region60: #{tpu_custom_call.1} parent=55 // pred_fallthru
          _
      $region56: #{tpu_custom_call.1} parent=5 // pred_fallthru
        _
      %p398 = scmp.le.s32.totalorder 1, %s26
      %p399 = scmp.lt.s32.totalorder %s26, 3
      %p400 = pnand %p398, %p399
      %p401 = pneg %p400
      // Predicated region
      $region61: #{tpu_custom_call.1} parent=5 // pred_check
        _
      $region62: #{tpu_custom_call.1} parent=5 // pred_check_branch
        %403 = sbr.rel (%p400) target = $region64
      $region63: #{tpu_custom_call.1} parent=5 // pred_region
        %s404 = ssub.s32 %s26, 1
        %s405 = sand.u32 %s39, 1
        %s406 = scalar_lea.sflag [#allocation3], %s405
        %s407 = sand.u32 %s39, 1
        %s408 = smul.addr %s407, 28
        %s409 = scalar_lea.vmem [#allocation2], %s408
        // Predicated region
        $region65: #{tpu_custom_call.1} parent=63 // pred_check
          %p410 = pneg %p52
        $region66: #{tpu_custom_call.1} parent=63 // pred_check_branch
          %412 = sbr.rel (%p410) target = $region68
        $region67: #{tpu_custom_call.1} parent=63 // pred_region
          %413 = dma.done %s406, 448
        $region68: #{tpu_custom_call.1} parent=63 // pred_fallthru
          _
        // Predicated region
        $region69: #{tpu_custom_call.1} parent=63 // pred_check
          %p414 = pneg %p73
        $region70: #{tpu_custom_call.1} parent=63 // pred_check_branch
          %416 = sbr.rel (%p414) target = $region72
        $region71: #{tpu_custom_call.1} parent=63 // pred_region
          %417 = dma.done [#allocation6], 14336
        $region72: #{tpu_custom_call.1} parent=63 // pred_fallthru
          _
        // Predicated region
        $region73: #{tpu_custom_call.1} parent=63 // pred_check
          %p418 = pneg %p94
        $region74: #{tpu_custom_call.1} parent=63 // pred_check_branch
          %420 = sbr.rel (%p418) target = $region76
        $region75: #{tpu_custom_call.1} parent=63 // pred_region
          %421 = dma.done [#allocation6], 32
        $region76: #{tpu_custom_call.1} parent=63 // pred_fallthru
          _
        // Predicated region
        $region77: #{tpu_custom_call.1} parent=63 // pred_check
          %p422 = pneg %p136
        $region78: #{tpu_custom_call.1} parent=63 // pred_check_branch
          %424 = sbr.rel (%p422) target = $region80
        $region79: #{tpu_custom_call.1} parent=63 // pred_region
          %425 = dma.done [#allocation9], 16
        $region80: #{tpu_custom_call.1} parent=63 // pred_fallthru
          _
        // Predicated region
        $region81: #{tpu_custom_call.1} parent=63 // pred_check
          %p426 = pneg %p178
        $region82: #{tpu_custom_call.1} parent=63 // pred_check_branch
          %428 = sbr.rel (%p426) target = $region84
        $region83: #{tpu_custom_call.1} parent=63 // pred_region
          %429 = dma.done [#allocation9], 16
        $region84: #{tpu_custom_call.1} parent=63 // pred_fallthru
          _
        // Predicated region
        $region85: #{tpu_custom_call.1} parent=63 // pred_check
          %p430 = pneg %p220
        $region86: #{tpu_custom_call.1} parent=63 // pred_check_branch
          %432 = sbr.rel (%p430) target = $region88
        $region87: #{tpu_custom_call.1} parent=63 // pred_region
          %433 = dma.done [#allocation12], 16
        $region88: #{tpu_custom_call.1} parent=63 // pred_fallthru
          _
        %s434 = sand.u32 %s39, 1
        %s435 = scalar_lea.sflag [#allocation3], %s434
        %s436 = sand.u32 %s39, 1
        %s437 = smul.addr %s436, 28
        %s438 = scalar_lea.vmem [#allocation2], %s437
        %p439 = pneg %p52
        %p440 = pneg %p49
        %p441 = pneg %p73
        %p442 = pneg %p70
        %p443 = pneg %p94
        %p444 = pneg %p91
        %p445 = pneg %p115
        %p446 = pneg %p112
        %p447 = pneg %p136
        %p448 = pneg %p133
        %p449 = pneg %p157
        %p450 = pneg %p154
        %p451 = pneg %p178
        %p452 = pneg %p175
        %p453 = pneg %p199
        %p454 = pneg %p196
        %p455 = pneg %p220
        %p456 = pneg %p217
        %p457 = pneg %p241
        %p458 = pneg %p238
        %p459 = pneg %p262
        %p460 = pneg %p259
        %p461 = pneg %p288
        %p462 = pneg %p285
        %s463 = sand.u32 %s275, 1
        %s464 = scalar_lea.sflag [#allocation4], %s463
        %s465 = sand.u32 %s275, 1
        %s466 = smul.addr %s465, 8
        %s467 = scalar_lea.vmem [#allocation13], %s466
        %v469 = vld [vmem:[%s409] sm:$0xff]
        %v470 = vld [vmem:[%s409 + $0x8] sm:$0xff]
        %v471 = vld [vmem:[%s409 + $0x10] sm:$0xff]
        %v472 = vld [vmem:[%s409 + $0x18] sm:$0xf]
        %v473 = vld [vmem:[#allocation5] sm:$0xff]
        %v474 = vld [vmem:[#allocation5 + $0x8] sm:$0xff]
        %v475 = vld [vmem:[#allocation5 + $0x10] sm:$0xff]
        %v476 = vld [vmem:[#allocation5 + $0x18] sm:$0xff]
        %v477 = vld [vmem:[#allocation5 + $0x20] sm:$0xff]
        %v478 = vld [vmem:[#allocation5 + $0x28] sm:$0xff]
        %v479 = vld [vmem:[#allocation5 + $0x30] sm:$0xff]
        %v480 = vld [vmem:[#allocation5 + $0x38] sm:$0xff]
        %v481 = vld [vmem:[#allocation5 + $0x40] sm:$0xff]
        %v482 = vld [vmem:[#allocation5 + $0x48] sm:$0xff]
        %v483 = vld [vmem:[#allocation5 + $0x50] sm:$0xff]
        %v484 = vld [vmem:[#allocation5 + $0x58] sm:$0xff]
        %v485 = vld [vmem:[#allocation5 + $0x60] sm:$0xff]
        %v486 = vld [vmem:[#allocation5 + $0x68] sm:$0xff]
        %v487 = vld [vmem:[#allocation5 + $0x70] sm:$0xff]
        %v488 = vld [vmem:[#allocation5 + $0x78] sm:$0xff]
        %v489 = vld [vmem:[#allocation5 + $0x80] sm:$0xff]
        %v490 = vld [vmem:[#allocation5 + $0x88] sm:$0xff]
        %v491 = vld [vmem:[#allocation5 + $0x90] sm:$0xff]
        %v492 = vld [vmem:[#allocation5 + $0x98] sm:$0xff]
        %v493 = vld [vmem:[#allocation5 + $0xa0] sm:$0xff]
        %v494 = vld [vmem:[#allocation5 + $0xa8] sm:$0xff]
        %v495 = vld [vmem:[#allocation5 + $0xb0] sm:$0xff]
        %v496 = vld [vmem:[#allocation5 + $0xb8] sm:$0xff]
        %v497 = vld [vmem:[#allocation5 + $0xc0] sm:$0xff]
        %v498 = vld [vmem:[#allocation5 + $0xc8] sm:$0xff]
        %v499 = vld [vmem:[#allocation5 + $0xd0] sm:$0xff]
        %v500 = vld [vmem:[#allocation5 + $0xd8] sm:$0xff]
        %v501 = vld [vmem:[#allocation5 + $0xe0] sm:$0xff]
        %v502 = vld [vmem:[#allocation5 + $0xe8] sm:$0xff]
        %v503 = vld [vmem:[#allocation5 + $0xf0] sm:$0xff]
        %v504 = vld [vmem:[#allocation5 + $0xf8] sm:$0xff]
        %v505 = vld [vmem:[#allocation5 + $0x100] sm:$0xff]
        %v506 = vld [vmem:[#allocation5 + $0x108] sm:$0xff]
        %v507 = vld [vmem:[#allocation5 + $0x110] sm:$0xff]
        %v508 = vld [vmem:[#allocation5 + $0x118] sm:$0xff]
        %v509 = vld [vmem:[#allocation5 + $0x120] sm:$0xff]
        %v510 = vld [vmem:[#allocation5 + $0x128] sm:$0xff]
        %v511 = vld [vmem:[#allocation5 + $0x130] sm:$0xff]
        %v512 = vld [vmem:[#allocation5 + $0x138] sm:$0xff]
        %v513 = vld [vmem:[#allocation5 + $0x140] sm:$0xff]
        %v514 = vld [vmem:[#allocation5 + $0x148] sm:$0xff]
        %v515 = vld [vmem:[#allocation5 + $0x150] sm:$0xff]
        %v516 = vld [vmem:[#allocation5 + $0x158] sm:$0xff]
        %v517 = vld [vmem:[#allocation5 + $0x160] sm:$0xff]
        %v518 = vld [vmem:[#allocation5 + $0x168] sm:$0xff]
        %v519 = vld [vmem:[#allocation5 + $0x170] sm:$0xff]
        %v520 = vld [vmem:[#allocation5 + $0x178] sm:$0xff]
        %v521 = vld [vmem:[#allocation5 + $0x180] sm:$0xff]
        %v522 = vld [vmem:[#allocation5 + $0x188] sm:$0xff]
        %v523 = vld [vmem:[#allocation5 + $0x190] sm:$0xff]
        %v524 = vld [vmem:[#allocation5 + $0x198] sm:$0xff]
        %v525 = vld [vmem:[#allocation5 + $0x1a0] sm:$0xff]
        %v526 = vld [vmem:[#allocation5 + $0x1a8] sm:$0xff]
        %v527 = vld [vmem:[#allocation5 + $0x1b0] sm:$0xff]
        %v528 = vld [vmem:[#allocation5 + $0x1b8] sm:$0xff]
        %v529 = vld [vmem:[#allocation5 + $0x1c0] sm:$0xff]
        %v530 = vld [vmem:[#allocation5 + $0x1c8] sm:$0xff]
        %v531 = vld [vmem:[#allocation5 + $0x1d0] sm:$0xff]
        %v532 = vld [vmem:[#allocation5 + $0x1d8] sm:$0xff]
        %v533 = vld [vmem:[#allocation5 + $0x1e0] sm:$0xff]
        %v534 = vld [vmem:[#allocation5 + $0x1e8] sm:$0xff]
        %v535 = vld [vmem:[#allocation5 + $0x1f0] sm:$0xff]
        %v536 = vld [vmem:[#allocation5 + $0x1f8] sm:$0xff]
        %v537 = vld [vmem:[#allocation5 + $0x200] sm:$0xff]
        %v538 = vld [vmem:[#allocation5 + $0x208] sm:$0xff]
        %v539 = vld [vmem:[#allocation5 + $0x210] sm:$0xff]
        %v540 = vld [vmem:[#allocation5 + $0x218] sm:$0xff]
        %v541 = vld [vmem:[#allocation5 + $0x220] sm:$0xff]
        %v542 = vld [vmem:[#allocation5 + $0x228] sm:$0xff]
        %v543 = vld [vmem:[#allocation5 + $0x230] sm:$0xff]
        %v544 = vld [vmem:[#allocation5 + $0x238] sm:$0xff]
        %v545 = vld [vmem:[#allocation5 + $0x240] sm:$0xff]
        %v546 = vld [vmem:[#allocation5 + $0x248] sm:$0xff]
        %v547 = vld [vmem:[#allocation5 + $0x250] sm:$0xff]
        %v548 = vld [vmem:[#allocation5 + $0x258] sm:$0xff]
        %v549 = vld [vmem:[#allocation5 + $0x260] sm:$0xff]
        %v550 = vld [vmem:[#allocation5 + $0x268] sm:$0xff]
        %v551 = vld [vmem:[#allocation5 + $0x270] sm:$0xff]
        %v552 = vld [vmem:[#allocation5 + $0x278] sm:$0xff]
        %v553 = vld [vmem:[#allocation5 + $0x280] sm:$0xff]
        %v554 = vld [vmem:[#allocation5 + $0x288] sm:$0xff]
        %v555 = vld [vmem:[#allocation5 + $0x290] sm:$0xff]
        %v556 = vld [vmem:[#allocation5 + $0x298] sm:$0xff]
        %v557 = vld [vmem:[#allocation5 + $0x2a0] sm:$0xff]
        %v558 = vld [vmem:[#allocation5 + $0x2a8] sm:$0xff]
        %v559 = vld [vmem:[#allocation5 + $0x2b0] sm:$0xff]
        %v560 = vld [vmem:[#allocation5 + $0x2b8] sm:$0xff]
        %v561 = vld [vmem:[#allocation5 + $0x2c0] sm:$0xff]
        %v562 = vld [vmem:[#allocation5 + $0x2c8] sm:$0xff]
        %v563 = vld [vmem:[#allocation5 + $0x2d0] sm:$0xff]
        %v564 = vld [vmem:[#allocation5 + $0x2d8] sm:$0xff]
        %v565 = vld [vmem:[#allocation5 + $0x2e0] sm:$0xff]
        %v566 = vld [vmem:[#allocation5 + $0x2e8] sm:$0xff]
        %v567 = vld [vmem:[#allocation5 + $0x2f0] sm:$0xff]
        %v568 = vld [vmem:[#allocation5 + $0x2f8] sm:$0xff]
        %v569 = vld [vmem:[#allocation5 + $0x300] sm:$0xff]
        %v570 = vld [vmem:[#allocation5 + $0x308] sm:$0xff]
        %v571 = vld [vmem:[#allocation5 + $0x310] sm:$0xff]
        %v572 = vld [vmem:[#allocation5 + $0x318] sm:$0xff]
        %v573 = vld [vmem:[#allocation5 + $0x320] sm:$0xff]
        %v574 = vld [vmem:[#allocation5 + $0x328] sm:$0xff]
        %v575 = vld [vmem:[#allocation5 + $0x330] sm:$0xff]
        %v576 = vld [vmem:[#allocation5 + $0x338] sm:$0xff]
        %v577 = vld [vmem:[#allocation5 + $0x340] sm:$0xff]
        %v578 = vld [vmem:[#allocation5 + $0x348] sm:$0xff]
        %v579 = vld [vmem:[#allocation5 + $0x350] sm:$0xff]
        %v580 = vld [vmem:[#allocation5 + $0x358] sm:$0xff]
        %v581 = vld [vmem:[#allocation5 + $0x360] sm:$0xff]
        %v582 = vld [vmem:[#allocation5 + $0x368] sm:$0xff]
        %v583 = vld [vmem:[#allocation5 + $0x370] sm:$0xff]
        %v584 = vld [vmem:[#allocation5 + $0x378] sm:$0xff]
        %v585 = vld [vmem:[#allocation7] sm:$0x3]
        %v587 = vlaneseq
        %v588 = vshrl.u32 %v587, 7
        %v589 = vsub.s32 0, %v588
        %v590 = vrot.slane %v585, %v589
        %v591 = vlaneseq
        %v592 = vshrl.u32 %v591, 7
        %v593 = vsub.s32 1, %v592
        %v594 = vrot.slane %v585, %v593
        %v601 = vunpack.c.l.b16 %v469
        %v602 = vunpack.c.h.b16 %v469
        %v603 = vunpack.c.l.b16 %v470
        %v604 = vunpack.c.h.b16 %v470
        %v605 = vunpack.c.l.b16 %v471
        %v606 = vunpack.c.h.b16 %v471
        %v607 = vunpack.c.l.b16 %v472
        %v608 = vpack.c.b16 %v601, %v601
        %v609 = vpack.c.b16 %v602, %v602
        %v610 = vpack.c.b16 %v603, %v603
        %v611 = vpack.c.b16 %v604, %v604
        %v612 = vpack.c.b16 %v605, %v605
        %v613 = vpack.c.b16 %v606, %v606
        %v614 = vpack.c.b16 %v607, %v607
        %v734 = vunpack.c.l.b16 %v473
        %v735 = vunpack.c.h.b16 %v473
        %v736 = vunpack.c.l.b16 %v474
        %v737 = vunpack.c.h.b16 %v474
        %v738 = vunpack.c.l.b16 %v475
        %v739 = vunpack.c.h.b16 %v475
        %v740 = vunpack.c.l.b16 %v476
        %v741 = vunpack.c.h.b16 %v476
        %v742 = vunpack.c.l.b16 %v477
        %v743 = vunpack.c.h.b16 %v477
        %v744 = vunpack.c.l.b16 %v478
        %v745 = vunpack.c.h.b16 %v478
        %v746 = vunpack.c.l.b16 %v479
        %v747 = vunpack.c.h.b16 %v479
        %v748 = vunpack.c.l.b16 %v480
        %v749 = vunpack.c.h.b16 %v480
        %v750 = vunpack.c.l.b16 %v481
        %v751 = vunpack.c.h.b16 %v481
        %v752 = vunpack.c.l.b16 %v482
        %v753 = vunpack.c.h.b16 %v482
        %v754 = vunpack.c.l.b16 %v483
        %v755 = vunpack.c.h.b16 %v483
        %v756 = vunpack.c.l.b16 %v484
        %v757 = vunpack.c.h.b16 %v484
        %v758 = vunpack.c.l.b16 %v485
        %v759 = vunpack.c.h.b16 %v485
        %v760 = vunpack.c.l.b16 %v486
        %v761 = vunpack.c.h.b16 %v486
        %v762 = vunpack.c.l.b16 %v487
        %v763 = vunpack.c.h.b16 %v487
        %v764 = vunpack.c.l.b16 %v488
        %v765 = vunpack.c.h.b16 %v488
        %v766 = vunpack.c.l.b16 %v489
        %v767 = vunpack.c.h.b16 %v489
        %v768 = vunpack.c.l.b16 %v490
        %v769 = vunpack.c.h.b16 %v490
        %v770 = vunpack.c.l.b16 %v491
        %v771 = vunpack.c.h.b16 %v491
        %v772 = vunpack.c.l.b16 %v492
        %v773 = vunpack.c.h.b16 %v492
        %v774 = vunpack.c.l.b16 %v493
        %v775 = vunpack.c.h.b16 %v493
        %v776 = vunpack.c.l.b16 %v494
        %v777 = vunpack.c.h.b16 %v494
        %v778 = vunpack.c.l.b16 %v495
        %v779 = vunpack.c.h.b16 %v495
        %v780 = vunpack.c.l.b16 %v496
        %v781 = vunpack.c.h.b16 %v496
        %v782 = vunpack.c.l.b16 %v497
        %v783 = vunpack.c.h.b16 %v497
        %v784 = vunpack.c.l.b16 %v498
        %v785 = vunpack.c.h.b16 %v498
        %v786 = vunpack.c.l.b16 %v499
        %v787 = vunpack.c.h.b16 %v499
        %v788 = vunpack.c.l.b16 %v500
        %v789 = vunpack.c.h.b16 %v500
        %v790 = vunpack.c.l.b16 %v501
        %v791 = vunpack.c.h.b16 %v501
        %v792 = vunpack.c.l.b16 %v502
        %v793 = vunpack.c.h.b16 %v502
        %v794 = vunpack.c.l.b16 %v503
        %v795 = vunpack.c.h.b16 %v503
        %v796 = vunpack.c.l.b16 %v504
        %v797 = vunpack.c.h.b16 %v504
        %v798 = vunpack.c.l.b16 %v505
        %v799 = vunpack.c.h.b16 %v505
        %v800 = vunpack.c.l.b16 %v506
        %v801 = vunpack.c.h.b16 %v506
        %v802 = vunpack.c.l.b16 %v507
        %v803 = vunpack.c.h.b16 %v507
        %v804 = vunpack.c.l.b16 %v508
        %v805 = vunpack.c.h.b16 %v508
        %v806 = vunpack.c.l.b16 %v509
        %v807 = vunpack.c.h.b16 %v509
        %v808 = vunpack.c.l.b16 %v510
        %v809 = vunpack.c.h.b16 %v510
        %v810 = vunpack.c.l.b16 %v511
        %v811 = vunpack.c.h.b16 %v511
        %v812 = vunpack.c.l.b16 %v512
        %v813 = vunpack.c.h.b16 %v512
        %v814 = vunpack.c.l.b16 %v513
        %v815 = vunpack.c.h.b16 %v513
        %v816 = vunpack.c.l.b16 %v514
        %v817 = vunpack.c.h.b16 %v514
        %v818 = vunpack.c.l.b16 %v515
        %v819 = vunpack.c.h.b16 %v515
        %v820 = vunpack.c.l.b16 %v516
        %v821 = vunpack.c.h.b16 %v516
        %v822 = vunpack.c.l.b16 %v517
        %v823 = vunpack.c.h.b16 %v517
        %v824 = vunpack.c.l.b16 %v518
        %v825 = vunpack.c.h.b16 %v518
        %v826 = vunpack.c.l.b16 %v519
        %v827 = vunpack.c.h.b16 %v519
        %v828 = vunpack.c.l.b16 %v520
        %v829 = vunpack.c.h.b16 %v520
        %v830 = vunpack.c.l.b16 %v521
        %v831 = vunpack.c.h.b16 %v521
        %v832 = vunpack.c.l.b16 %v522
        %v833 = vunpack.c.h.b16 %v522
        %v834 = vunpack.c.l.b16 %v523
        %v835 = vunpack.c.h.b16 %v523
        %v836 = vunpack.c.l.b16 %v524
        %v837 = vunpack.c.h.b16 %v524
        %v838 = vunpack.c.l.b16 %v525
        %v839 = vunpack.c.h.b16 %v525
        %v840 = vunpack.c.l.b16 %v526
        %v841 = vunpack.c.h.b16 %v526
        %v842 = vunpack.c.l.b16 %v527
        %v843 = vunpack.c.h.b16 %v527
        %v844 = vunpack.c.l.b16 %v528
        %v845 = vunpack.c.h.b16 %v528
        %v846 = vunpack.c.l.b16 %v529
        %v847 = vunpack.c.h.b16 %v529
        %v848 = vunpack.c.l.b16 %v530
        %v849 = vunpack.c.h.b16 %v530
        %v850 = vunpack.c.l.b16 %v531
        %v851 = vunpack.c.h.b16 %v531
        %v852 = vunpack.c.l.b16 %v532
        %v853 = vunpack.c.h.b16 %v532
        %v854 = vunpack.c.l.b16 %v533
        %v855 = vunpack.c.h.b16 %v533
        %v856 = vunpack.c.l.b16 %v534
        %v857 = vunpack.c.h.b16 %v534
        %v858 = vunpack.c.l.b16 %v535
        %v859 = vunpack.c.h.b16 %v535
        %v860 = vunpack.c.l.b16 %v536
        %v861 = vunpack.c.h.b16 %v536
        %v862 = vunpack.c.l.b16 %v537
        %v863 = vunpack.c.h.b16 %v537
        %v864 = vunpack.c.l.b16 %v538
        %v865 = vunpack.c.h.b16 %v538
        %v866 = vunpack.c.l.b16 %v539
        %v867 = vunpack.c.h.b16 %v539
        %v868 = vunpack.c.l.b16 %v540
        %v869 = vunpack.c.h.b16 %v540
        %v870 = vunpack.c.l.b16 %v541
        %v871 = vunpack.c.h.b16 %v541
        %v872 = vunpack.c.l.b16 %v542
        %v873 = vunpack.c.h.b16 %v542
        %v874 = vunpack.c.l.b16 %v543
        %v875 = vunpack.c.h.b16 %v543
        %v876 = vunpack.c.l.b16 %v544
        %v877 = vunpack.c.h.b16 %v544
        %v878 = vunpack.c.l.b16 %v545
        %v879 = vunpack.c.h.b16 %v545
        %v880 = vunpack.c.l.b16 %v546
        %v881 = vunpack.c.h.b16 %v546
        %v882 = vunpack.c.l.b16 %v547
        %v883 = vunpack.c.h.b16 %v547
        %v884 = vunpack.c.l.b16 %v548
        %v885 = vunpack.c.h.b16 %v548
        %v886 = vunpack.c.l.b16 %v549
        %v887 = vunpack.c.h.b16 %v549
        %v888 = vunpack.c.l.b16 %v550
        %v889 = vunpack.c.h.b16 %v550
        %v890 = vunpack.c.l.b16 %v551
        %v891 = vunpack.c.h.b16 %v551
        %v892 = vunpack.c.l.b16 %v552
        %v893 = vunpack.c.h.b16 %v552
        %v894 = vunpack.c.l.b16 %v553
        %v895 = vunpack.c.h.b16 %v553
        %v896 = vunpack.c.l.b16 %v554
        %v897 = vunpack.c.h.b16 %v554
        %v898 = vunpack.c.l.b16 %v555
        %v899 = vunpack.c.h.b16 %v555
        %v900 = vunpack.c.l.b16 %v556
        %v901 = vunpack.c.h.b16 %v556
        %v902 = vunpack.c.l.b16 %v557
        %v903 = vunpack.c.h.b16 %v557
        %v904 = vunpack.c.l.b16 %v558
        %v905 = vunpack.c.h.b16 %v558
        %v906 = vunpack.c.l.b16 %v559
        %v907 = vunpack.c.h.b16 %v559
        %v908 = vunpack.c.l.b16 %v560
        %v909 = vunpack.c.h.b16 %v560
        %v910 = vunpack.c.l.b16 %v561
        %v911 = vunpack.c.h.b16 %v561
        %v912 = vunpack.c.l.b16 %v562
        %v913 = vunpack.c.h.b16 %v562
        %v914 = vunpack.c.l.b16 %v563
        %v915 = vunpack.c.h.b16 %v563
        %v916 = vunpack.c.l.b16 %v564
        %v917 = vunpack.c.h.b16 %v564
        %v918 = vunpack.c.l.b16 %v565
        %v919 = vunpack.c.h.b16 %v565
        %v920 = vunpack.c.l.b16 %v566
        %v921 = vunpack.c.h.b16 %v566
        %v922 = vunpack.c.l.b16 %v567
        %v923 = vunpack.c.h.b16 %v567
        %v924 = vunpack.c.l.b16 %v568
        %v925 = vunpack.c.h.b16 %v568
        %v926 = vunpack.c.l.b16 %v569
        %v927 = vunpack.c.h.b16 %v569
        %v928 = vunpack.c.l.b16 %v570
        %v929 = vunpack.c.h.b16 %v570
        %v930 = vunpack.c.l.b16 %v571
        %v931 = vunpack.c.h.b16 %v571
        %v932 = vunpack.c.l.b16 %v572
        %v933 = vunpack.c.h.b16 %v572
        %v934 = vunpack.c.l.b16 %v573
        %v935 = vunpack.c.h.b16 %v573
        %v936 = vunpack.c.l.b16 %v574
        %v937 = vunpack.c.h.b16 %v574
        %v938 = vunpack.c.l.b16 %v575
        %v939 = vunpack.c.h.b16 %v575
        %v940 = vunpack.c.l.b16 %v576
        %v941 = vunpack.c.h.b16 %v576
        %v942 = vunpack.c.l.b16 %v577
        %v943 = vunpack.c.h.b16 %v577
        %v944 = vunpack.c.l.b16 %v578
        %v945 = vunpack.c.h.b16 %v578
        %v946 = vunpack.c.l.b16 %v579
        %v947 = vunpack.c.h.b16 %v579
        %v948 = vunpack.c.l.b16 %v580
        %v949 = vunpack.c.h.b16 %v580
        %v950 = vunpack.c.l.b16 %v581
        %v951 = vunpack.c.h.b16 %v581
        %v952 = vunpack.c.l.b16 %v582
        %v953 = vunpack.c.h.b16 %v582
        %v954 = vunpack.c.l.b16 %v583
        %v955 = vunpack.c.h.b16 %v583
        %v956 = vunpack.c.l.b16 %v584
        %v957 = vunpack.c.h.b16 %v584
        %v958 = vpack.c.b16 %v736, %v734
        %v959 = vpack.c.b16 %v737, %v735
        %v960 = vpack.c.b16 %v740, %v738
        %v961 = vpack.c.b16 %v741, %v739
        %v962 = vpack.c.b16 %v744, %v742
        %v963 = vpack.c.b16 %v745, %v743
        %v964 = vpack.c.b16 %v748, %v746
        %v965 = vpack.c.b16 %v749, %v747
        %v966 = vpack.c.b16 %v752, %v750
        %v967 = vpack.c.b16 %v753, %v751
        %v968 = vpack.c.b16 %v756, %v754
        %v969 = vpack.c.b16 %v757, %v755
        %v970 = vpack.c.b16 %v760, %v758
        %v971 = vpack.c.b16 %v761, %v759
        %v972 = vpack.c.b16 %v764, %v762
        %v973 = vpack.c.b16 %v765, %v763
        %v974 = vpack.c.b16 %v768, %v766
        %v975 = vpack.c.b16 %v769, %v767
        %v976 = vpack.c.b16 %v772, %v770
        %v977 = vpack.c.b16 %v773, %v771
        %v978 = vpack.c.b16 %v776, %v774
        %v979 = vpack.c.b16 %v777, %v775
        %v980 = vpack.c.b16 %v780, %v778
        %v981 = vpack.c.b16 %v781, %v779
        %v982 = vpack.c.b16 %v784, %v782
        %v983 = vpack.c.b16 %v785, %v783
        %v984 = vpack.c.b16 %v788, %v786
        %v985 = vpack.c.b16 %v789, %v787
        %v986 = vpack.c.b16 %v792, %v790
        %v987 = vpack.c.b16 %v793, %v791
        %v988 = vpack.c.b16 %v796, %v794
        %v989 = vpack.c.b16 %v797, %v795
        %v990 = vpack.c.b16 %v800, %v798
        %v991 = vpack.c.b16 %v801, %v799
        %v992 = vpack.c.b16 %v804, %v802
        %v993 = vpack.c.b16 %v805, %v803
        %v994 = vpack.c.b16 %v808, %v806
        %v995 = vpack.c.b16 %v809, %v807
        %v996 = vpack.c.b16 %v812, %v810
        %v997 = vpack.c.b16 %v813, %v811
        %v998 = vpack.c.b16 %v816, %v814
        %v999 = vpack.c.b16 %v817, %v815
        %v1000 = vpack.c.b16 %v820, %v818
        %v1001 = vpack.c.b16 %v821, %v819
        %v1002 = vpack.c.b16 %v824, %v822
        %v1003 = vpack.c.b16 %v825, %v823
        %v1004 = vpack.c.b16 %v828, %v826
        %v1005 = vpack.c.b16 %v829, %v827
        %v1006 = vpack.c.b16 %v832, %v830
        %v1007 = vpack.c.b16 %v833, %v831
        %v1008 = vpack.c.b16 %v836, %v834
        %v1009 = vpack.c.b16 %v837, %v835
        %v1010 = vpack.c.b16 %v840, %v838
        %v1011 = vpack.c.b16 %v841, %v839
        %v1012 = vpack.c.b16 %v844, %v842
        %v1013 = vpack.c.b16 %v845, %v843
        %v1014 = vpack.c.b16 %v848, %v846
        %v1015 = vpack.c.b16 %v849, %v847
        %v1016 = vpack.c.b16 %v852, %v850
        %v1017 = vpack.c.b16 %v853, %v851
        %v1018 = vpack.c.b16 %v856, %v854
        %v1019 = vpack.c.b16 %v857, %v855
        %v1020 = vpack.c.b16 %v860, %v858
        %v1021 = vpack.c.b16 %v861, %v859
        %v1022 = vpack.c.b16 %v864, %v862
        %v1023 = vpack.c.b16 %v865, %v863
        %v1024 = vpack.c.b16 %v868, %v866
        %v1025 = vpack.c.b16 %v869, %v867
        %v1026 = vpack.c.b16 %v872, %v870
        %v1027 = vpack.c.b16 %v873, %v871
        %v1028 = vpack.c.b16 %v876, %v874
        %v1029 = vpack.c.b16 %v877, %v875
        %v1030 = vpack.c.b16 %v880, %v878
        %v1031 = vpack.c.b16 %v881, %v879
        %v1032 = vpack.c.b16 %v884, %v882
        %v1033 = vpack.c.b16 %v885, %v883
        %v1034 = vpack.c.b16 %v888, %v886
        %v1035 = vpack.c.b16 %v889, %v887
        %v1036 = vpack.c.b16 %v892, %v890
        %v1037 = vpack.c.b16 %v893, %v891
        %v1038 = vpack.c.b16 %v896, %v894
        %v1039 = vpack.c.b16 %v897, %v895
        %v1040 = vpack.c.b16 %v900, %v898
        %v1041 = vpack.c.b16 %v901, %v899
        %v1042 = vpack.c.b16 %v904, %v902
        %v1043 = vpack.c.b16 %v905, %v903
        %v1044 = vpack.c.b16 %v908, %v906
        %v1045 = vpack.c.b16 %v909, %v907
        %v1046 = vpack.c.b16 %v912, %v910
        %v1047 = vpack.c.b16 %v913, %v911
        %v1048 = vpack.c.b16 %v916, %v914
        %v1049 = vpack.c.b16 %v917, %v915
        %v1050 = vpack.c.b16 %v920, %v918
        %v1051 = vpack.c.b16 %v921, %v919
        %v1052 = vpack.c.b16 %v924, %v922
        %v1053 = vpack.c.b16 %v925, %v923
        %v1054 = vpack.c.b16 %v928, %v926
        %v1055 = vpack.c.b16 %v929, %v927
        %v1056 = vpack.c.b16 %v932, %v930
        %v1057 = vpack.c.b16 %v933, %v931
        %v1058 = vpack.c.b16 %v936, %v934
        %v1059 = vpack.c.b16 %v937, %v935
        %v1060 = vpack.c.b16 %v940, %v938
        %v1061 = vpack.c.b16 %v941, %v939
        %v1062 = vpack.c.b16 %v944, %v942
        %v1063 = vpack.c.b16 %v945, %v943
        %v1064 = vpack.c.b16 %v948, %v946
        %v1065 = vpack.c.b16 %v949, %v947
        %v1066 = vpack.c.b16 %v952, %v950
        %v1067 = vpack.c.b16 %v953, %v951
        %v1068 = vpack.c.b16 %v956, %v954
        %v1069 = vpack.c.b16 %v957, %v955
        %1182 = vmatprep.subr.bf16.mxu0 %v973
        %1183 = vmatpush1.bf16.msra.mxu0 %v972
        %1184 = vmatprep.subr.bf16.mxu0 %v971
        %1185 = vmatpush1.bf16.msra.mxu0 %v970
        %1186 = vmatprep.subr.bf16.mxu0 %v969
        %1187 = vmatpush1.bf16.msra.mxu0 %v968
        %1188 = vmatprep.subr.bf16.mxu0 %v967
        %1189 = vmatpush1.bf16.msra.mxu0 %v966
        %1190 = vmatprep.subr.bf16.mxu0 %v965
        %1191 = vmatpush1.bf16.msra.mxu0 %v964
        %1192 = vmatprep.subr.bf16.mxu0 %v963
        %1193 = vmatpush1.bf16.msra.mxu0 %v962
        %1194 = vmatprep.subr.bf16.mxu0 %v961
        %1195 = vmatpush1.bf16.msra.mxu0 %v960
        %1196 = vmatprep.subr.bf16.mxu0 %v959
        %1197 = vmatpush1.bf16.msra.mxu0 %v958
        %1198 = vmatprep.subr.bf16.mxu0 %v989
        %1199 = vmatpush2.bf16.msra.mxu0 %v988
        %1200 = vmatprep.subr.bf16.mxu0 %v987
        %1201 = vmatpush2.bf16.msra.mxu0 %v986
        %1202 = vmatprep.subr.bf16.mxu0 %v985
        %1203 = vmatpush2.bf16.msra.mxu0 %v984
        %1204 = vmatprep.subr.bf16.mxu0 %v983
        %1205 = vmatpush2.bf16.msra.mxu0 %v982
        %1206 = vmatprep.subr.bf16.mxu0 %v981
        %1207 = vmatpush2.bf16.msra.mxu0 %v980
        %1208 = vmatprep.subr.bf16.mxu0 %v979
        %1209 = vmatpush2.bf16.msra.mxu0 %v978
        %1210 = vmatprep.subr.bf16.mxu0 %v977
        %1211 = vmatpush2.bf16.msra.mxu0 %v976
        %1212 = vmatprep.subr.bf16.mxu0 %v975
        %1213 = vmatpush2.bf16.msra.mxu0 %v974
        %1214 = vmatprep.mubr.bf16.mxu0 %v609
        %1215 = vmatmul.mubr.bf16.gmra.mxu0 %v608
        %v1216 = vpop.f32.mrf.mxu0
        %v1217 = vadd.f32 %v590, %v1216
        %v1218 = vpop.f32.mrf.mxu0
        %v1219 = vadd.f32 %v594, %v1218
        %v1220 = vpop.f32.mrf.mxu0
        %v1221 = vpop.f32.mrf.mxu0
        %1222 = vdwg.mxu0
        %1223 = vmatprep.subr.bf16.mxu0 %v1005
        %1224 = vmatpush1.bf16.msra.mxu0 %v1004
        %1225 = vmatprep.subr.bf16.mxu0 %v1003
        %1226 = vmatpush1.bf16.msra.mxu0 %v1002
        %1227 = vmatprep.subr.bf16.mxu0 %v1001
        %1228 = vmatpush1.bf16.msra.mxu0 %v1000
        %1229 = vmatprep.subr.bf16.mxu0 %v999
        %1230 = vmatpush1.bf16.msra.mxu0 %v998
        %1231 = vmatprep.subr.bf16.mxu0 %v997
        %1232 = vmatpush1.bf16.msra.mxu0 %v996
        %1233 = vmatprep.subr.bf16.mxu0 %v995
        %1234 = vmatpush1.bf16.msra.mxu0 %v994
        %1235 = vmatprep.subr.bf16.mxu0 %v993
        %1236 = vmatpush1.bf16.msra.mxu0 %v992
        %1237 = vmatprep.subr.bf16.mxu0 %v991
        %1238 = vmatpush1.bf16.msra.mxu0 %v990
        %1239 = vmatprep.subr.bf16.mxu0 %v1021
        %1240 = vmatpush2.bf16.msra.mxu0 %v1020
        %1241 = vmatprep.subr.bf16.mxu0 %v1019
        %1242 = vmatpush2.bf16.msra.mxu0 %v1018
        %1243 = vmatprep.subr.bf16.mxu0 %v1017
        %1244 = vmatpush2.bf16.msra.mxu0 %v1016
        %1245 = vmatprep.subr.bf16.mxu0 %v1015
        %1246 = vmatpush2.bf16.msra.mxu0 %v1014
        %1247 = vmatprep.subr.bf16.mxu0 %v1013
        %1248 = vmatpush2.bf16.msra.mxu0 %v1012
        %1249 = vmatprep.subr.bf16.mxu0 %v1011
        %1250 = vmatpush2.bf16.msra.mxu0 %v1010
        %1251 = vmatprep.subr.bf16.mxu0 %v1009
        %1252 = vmatpush2.bf16.msra.mxu0 %v1008
        %1253 = vmatprep.subr.bf16.mxu0 %v1007
        %1254 = vmatpush2.bf16.msra.mxu0 %v1006
        %1255 = vmatprep.mubr.bf16.mxu0 %v611
        %1256 = vmatmul.mubr.bf16.gmra.mxu0 %v610
        %v1257 = vpop.f32.mrf.mxu0
        %v1258 = vadd.f32 %v1217, %v1257
        %v1259 = vpop.f32.mrf.mxu0
        %v1260 = vadd.f32 %v1219, %v1259
        %v1261 = vpop.f32.mrf.mxu0
        %v1262 = vpop.f32.mrf.mxu0
        %1263 = vdwg.mxu0
        %1264 = vmatprep.subr.bf16.mxu0 %v1037
        %1265 = vmatpush1.bf16.msra.mxu0 %v1036
        %1266 = vmatprep.subr.bf16.mxu0 %v1035
        %1267 = vmatpush1.bf16.msra.mxu0 %v1034
        %1268 = vmatprep.subr.bf16.mxu0 %v1033
        %1269 = vmatpush1.bf16.msra.mxu0 %v1032
        %1270 = vmatprep.subr.bf16.mxu0 %v1031
        %1271 = vmatpush1.bf16.msra.mxu0 %v1030
        %1272 = vmatprep.subr.bf16.mxu0 %v1029
        %1273 = vmatpush1.bf16.msra.mxu0 %v1028
        %1274 = vmatprep.subr.bf16.mxu0 %v1027
        %1275 = vmatpush1.bf16.msra.mxu0 %v1026
        %1276 = vmatprep.subr.bf16.mxu0 %v1025
        %1277 = vmatpush1.bf16.msra.mxu0 %v1024
        %1278 = vmatprep.subr.bf16.mxu0 %v1023
        %1279 = vmatpush1.bf16.msra.mxu0 %v1022
        %1280 = vmatprep.subr.bf16.mxu0 %v1053
        %1281 = vmatpush2.bf16.msra.mxu0 %v1052
        %1282 = vmatprep.subr.bf16.mxu0 %v1051
        %1283 = vmatpush2.bf16.msra.mxu0 %v1050
        %1284 = vmatprep.subr.bf16.mxu0 %v1049
        %1285 = vmatpush2.bf16.msra.mxu0 %v1048
        %1286 = vmatprep.subr.bf16.mxu0 %v1047
        %1287 = vmatpush2.bf16.msra.mxu0 %v1046
        %1288 = vmatprep.subr.bf16.mxu0 %v1045
        %1289 = vmatpush2.bf16.msra.mxu0 %v1044
        %1290 = vmatprep.subr.bf16.mxu0 %v1043
        %1291 = vmatpush2.bf16.msra.mxu0 %v1042
        %1292 = vmatprep.subr.bf16.mxu0 %v1041
        %1293 = vmatpush2.bf16.msra.mxu0 %v1040
        %1294 = vmatprep.subr.bf16.mxu0 %v1039
        %1295 = vmatpush2.bf16.msra.mxu0 %v1038
        %1296 = vmatprep.mubr.bf16.mxu0 %v613
        %1297 = vmatmul.mubr.bf16.gmra.mxu0 %v612
        %v1298 = vpop.f32.mrf.mxu0
        %v1299 = vadd.f32 %v1258, %v1298
        %v1300 = vpop.f32.mrf.mxu0
        %v1301 = vadd.f32 %v1260, %v1300
        %v1302 = vpop.f32.mrf.mxu0
        %v1303 = vpop.f32.mrf.mxu0
        %1304 = vdwg.mxu0
        %1305 = vmatprep.subr.bf16.mxu0 %v1069
        %1306 = vmatpush1.bf16.msra.mxu0 %v1068
        %1307 = vmatprep.subr.bf16.mxu0 %v1067
        %1308 = vmatpush1.bf16.msra.mxu0 %v1066
        %1309 = vmatprep.subr.bf16.mxu0 %v1065
        %1310 = vmatpush1.bf16.msra.mxu0 %v1064
        %1311 = vmatprep.subr.bf16.mxu0 %v1063
        %1312 = vmatpush1.bf16.msra.mxu0 %v1062
        %1313 = vmatprep.subr.bf16.mxu0 %v1061
        %1314 = vmatpush1.bf16.msra.mxu0 %v1060
        %1315 = vmatprep.subr.bf16.mxu0 %v1059
        %1316 = vmatpush1.bf16.msra.mxu0 %v1058
        %1317 = vmatprep.subr.bf16.mxu0 %v1057
        %1318 = vmatpush1.bf16.msra.mxu0 %v1056
        %1319 = vmatprep.subr.bf16.mxu0 %v1055
        %1320 = vmatpush1.bf16.msra.mxu0 %v1054
        %1321 = vmatprep.subr.bf16.mxu0 0
        %1322 = vmatpush2.bf16.msra.mxu0 0
        %1323 = vmatprep.subr.bf16.mxu0 0
        %1324 = vmatpush2.bf16.msra.mxu0 0
        %1325 = vmatprep.subr.bf16.mxu0 0
        %1326 = vmatpush2.bf16.msra.mxu0 0
        %1327 = vmatprep.subr.bf16.mxu0 0
        %1328 = vmatpush2.bf16.msra.mxu0 0
        %1329 = vmatprep.subr.bf16.mxu0 0
        %1330 = vmatpush2.bf16.msra.mxu0 0
        %1331 = vmatprep.subr.bf16.mxu0 0
        %1332 = vmatpush2.bf16.msra.mxu0 0
        %1333 = vmatprep.subr.bf16.mxu0 0
        %1334 = vmatpush2.bf16.msra.mxu0 0
        %1335 = vmatprep.subr.bf16.mxu0 0
        %1336 = vmatpush2.bf16.msra.mxu0 0
        %1337 = vmatprep.mubr.bf16.mxu0 0
        %1338 = vmatmul.mubr.bf16.gmra.mxu0 %v614
        %v1339 = vpop.f32.mrf.mxu0
        %v1340 = vadd.f32 %v1299, %v1339
        %v1341 = vpop.f32.mrf.mxu0
        %v1342 = vadd.f32 %v1301, %v1341
        %v1343 = vpop.f32.mrf.mxu0
        %v1344 = vpop.f32.mrf.mxu0
        %1345 = vdwg.mxu0
        %v1346 = vmax.f32 %v1340, 0.0
        %v1347 = vmax.f32 %v1342, 0.0
        %v1348 = vpack.c.bf16 %v1346, %v1346
        %v1349 = vpack.c.bf16 %v1347, %v1347
        %v1350 = vld [vmem:[%s3] sm:$0xf]
        %v1351 = vld [vmem:[%s3 + $0x4] sm:$0xf]
        %v1352 = vld [vmem:[%s3 + $0x8] sm:$0xf]
        %v1353 = vld [vmem:[%s3 + $0xc] sm:$0xf]
        %v1354 = vld [vmem:[%s3 + $0x10] sm:$0xf]
        %v1355 = vld [vmem:[%s3 + $0x14] sm:$0xf]
        %v1356 = vld [vmem:[%s3 + $0x18] sm:$0xf]
        %v1357 = vld [vmem:[%s3 + $0x1c] sm:$0xf]
        %v1358 = vld [vmem:[%s3 + $0x20] sm:$0xf]
        %v1359 = vld [vmem:[%s3 + $0x24] sm:$0xf]
        %v1360 = vld [vmem:[%s3 + $0x28] sm:$0xf]
        %v1361 = vld [vmem:[%s3 + $0x2c] sm:$0xf]
        %v1362 = vld [vmem:[%s3 + $0x30] sm:$0xf]
        %v1363 = vld [vmem:[%s3 + $0x34] sm:$0xf]
        %v1364 = vld [vmem:[%s3 + $0x38] sm:$0xf]
        %v1365 = vld [vmem:[%s3 + $0x3c] sm:$0xf]
        %v1366 = vld [vmem:[%s3 + $0x40] sm:$0xf]
        %v1367 = vld [vmem:[%s3 + $0x44] sm:$0xf]
        %v1368 = vld [vmem:[%s3 + $0x48] sm:$0xf]
        %v1369 = vld [vmem:[%s3 + $0x4c] sm:$0xf]
        %v1370 = vld [vmem:[%s3 + $0x50] sm:$0xf]
        %v1371 = vld [vmem:[%s3 + $0x54] sm:$0xf]
        %v1372 = vld [vmem:[%s3 + $0x58] sm:$0xf]
        %v1373 = vld [vmem:[%s3 + $0x5c] sm:$0xf]
        %v1374 = vld [vmem:[%s3 + $0x60] sm:$0xf]
        %v1375 = vld [vmem:[%s3 + $0x64] sm:$0xf]
        %v1376 = vld [vmem:[%s3 + $0x68] sm:$0xf]
        %v1377 = vld [vmem:[%s3 + $0x6c] sm:$0xf]
        %v1378 = vld [vmem:[%s3 + $0x70] sm:$0xf]
        %v1379 = vld [vmem:[%s3 + $0x74] sm:$0xf]
        %v1380 = vld [vmem:[%s3 + $0x78] sm:$0xf]
        %v1381 = vld [vmem:[%s3 + $0x7c] sm:$0xf]
        %v1382 = vld [vmem:[#allocation8] sm:$0x1]
        %v1384 = vlaneseq
        %v1385 = vshrl.u32 %v1384, 7
        %v1386 = vsub.s32 0, %v1385
        %v1387 = vrot.slane %v1382, %v1386
        %v1421 = vunpack.c.l.b16 %v1350
        %v1422 = vunpack.c.l.b16 %v1351
        %v1423 = vunpack.c.l.b16 %v1352
        %v1424 = vunpack.c.l.b16 %v1353
        %v1425 = vunpack.c.l.b16 %v1354
        %v1426 = vunpack.c.l.b16 %v1355
        %v1427 = vunpack.c.l.b16 %v1356
        %v1428 = vunpack.c.l.b16 %v1357
        %v1429 = vunpack.c.l.b16 %v1358
        %v1430 = vunpack.c.l.b16 %v1359
        %v1431 = vunpack.c.l.b16 %v1360
        %v1432 = vunpack.c.l.b16 %v1361
        %v1433 = vunpack.c.l.b16 %v1362
        %v1434 = vunpack.c.l.b16 %v1363
        %v1435 = vunpack.c.l.b16 %v1364
        %v1436 = vunpack.c.l.b16 %v1365
        %v1437 = vunpack.c.l.b16 %v1366
        %v1438 = vunpack.c.l.b16 %v1367
        %v1439 = vunpack.c.l.b16 %v1368
        %v1440 = vunpack.c.l.b16 %v1369
        %v1441 = vunpack.c.l.b16 %v1370
        %v1442 = vunpack.c.l.b16 %v1371
        %v1443 = vunpack.c.l.b16 %v1372
        %v1444 = vunpack.c.l.b16 %v1373
        %v1445 = vunpack.c.l.b16 %v1374
        %v1446 = vunpack.c.l.b16 %v1375
        %v1447 = vunpack.c.l.b16 %v1376
        %v1448 = vunpack.c.l.b16 %v1377
        %v1449 = vunpack.c.l.b16 %v1378
        %v1450 = vunpack.c.l.b16 %v1379
        %v1451 = vunpack.c.l.b16 %v1380
        %v1452 = vunpack.c.l.b16 %v1381
        %v1453 = vpack.c.b16 %v1422, %v1421
        %v1454 = vpack.c.b16 %v1424, %v1423
        %v1455 = vpack.c.b16 %v1426, %v1425
        %v1456 = vpack.c.b16 %v1428, %v1427
        %v1457 = vpack.c.b16 %v1430, %v1429
        %v1458 = vpack.c.b16 %v1432, %v1431
        %v1459 = vpack.c.b16 %v1434, %v1433
        %v1460 = vpack.c.b16 %v1436, %v1435
        %v1461 = vpack.c.b16 %v1438, %v1437
        %v1462 = vpack.c.b16 %v1440, %v1439
        %v1463 = vpack.c.b16 %v1442, %v1441
        %v1464 = vpack.c.b16 %v1444, %v1443
        %v1465 = vpack.c.b16 %v1446, %v1445
        %v1466 = vpack.c.b16 %v1448, %v1447
        %v1467 = vpack.c.b16 %v1450, %v1449
        %v1468 = vpack.c.b16 %v1452, %v1451
        %1485 = vmatprep.subr.bf16.mxu0 0
        %1486 = vmatpush1.bf16.msra.mxu0 %v1460
        %1487 = vmatprep.subr.bf16.mxu0 0
        %1488 = vmatpush1.bf16.msra.mxu0 %v1459
        %1489 = vmatprep.subr.bf16.mxu0 0
        %1490 = vmatpush1.bf16.msra.mxu0 %v1458
        %1491 = vmatprep.subr.bf16.mxu0 0
        %1492 = vmatpush1.bf16.msra.mxu0 %v1457
        %1493 = vmatprep.subr.bf16.mxu0 0
        %1494 = vmatpush1.bf16.msra.mxu0 %v1456
        %1495 = vmatprep.subr.bf16.mxu0 0
        %1496 = vmatpush1.bf16.msra.mxu0 %v1455
        %1497 = vmatprep.subr.bf16.mxu0 0
        %1498 = vmatpush1.bf16.msra.mxu0 %v1454
        %1499 = vmatprep.subr.bf16.mxu0 0
        %1500 = vmatpush1.bf16.msra.mxu0 %v1453
        %1501 = vmatprep.subr.bf16.mxu0 0
        %1502 = vmatpush2.bf16.msra.mxu0 %v1468
        %1503 = vmatprep.subr.bf16.mxu0 0
        %1504 = vmatpush2.bf16.msra.mxu0 %v1467
        %1505 = vmatprep.subr.bf16.mxu0 0
        %1506 = vmatpush2.bf16.msra.mxu0 %v1466
        %1507 = vmatprep.subr.bf16.mxu0 0
        %1508 = vmatpush2.bf16.msra.mxu0 %v1465
        %1509 = vmatprep.subr.bf16.mxu0 0
        %1510 = vmatpush2.bf16.msra.mxu0 %v1464
        %1511 = vmatprep.subr.bf16.mxu0 0
        %1512 = vmatpush2.bf16.msra.mxu0 %v1463
        %1513 = vmatprep.subr.bf16.mxu0 0
        %1514 = vmatpush2.bf16.msra.mxu0 %v1462
        %1515 = vmatprep.subr.bf16.mxu0 0
        %1516 = vmatpush2.bf16.msra.mxu0 %v1461
        %1517 = vmatprep.mubr.bf16.mxu0 %v1349
        %1518 = vmatmul.mubr.bf16.gmra.mxu0 %v1348
        %v1519 = vpop.f32.mrf.mxu0
        %v1520 = vadd.f32 %v1387, %v1519
        %v1521 = vpop.f32.mrf.mxu0
        %v1522 = vpop.f32.mrf.mxu0
        %v1523 = vpop.f32.mrf.mxu0
        %1524 = vdwg.mxu0
        %v1525 = vmax.f32 %v1520, 0.0
        %v1526 = vpack.c.bf16 %v1525, %v1525
        %v1527 = vld [vmem:[%s5] sm:$0xf]
        %v1528 = vld [vmem:[%s5 + $0x4] sm:$0xf]
        %v1529 = vld [vmem:[%s5 + $0x8] sm:$0xf]
        %v1530 = vld [vmem:[%s5 + $0xc] sm:$0xf]
        %v1531 = vld [vmem:[%s5 + $0x10] sm:$0xf]
        %v1532 = vld [vmem:[%s5 + $0x14] sm:$0xf]
        %v1533 = vld [vmem:[%s5 + $0x18] sm:$0xf]
        %v1534 = vld [vmem:[%s5 + $0x1c] sm:$0xf]
        %v1535 = vld [vmem:[%s5 + $0x20] sm:$0xf]
        %v1536 = vld [vmem:[%s5 + $0x24] sm:$0xf]
        %v1537 = vld [vmem:[%s5 + $0x28] sm:$0xf]
        %v1538 = vld [vmem:[%s5 + $0x2c] sm:$0xf]
        %v1539 = vld [vmem:[%s5 + $0x30] sm:$0xf]
        %v1540 = vld [vmem:[%s5 + $0x34] sm:$0xf]
        %v1541 = vld [vmem:[%s5 + $0x38] sm:$0xf]
        %v1542 = vld [vmem:[%s5 + $0x3c] sm:$0xf]
        %v1543 = vld [vmem:[#allocation10] sm:$0x1]
        %v1545 = vlaneseq
        %v1546 = vshrl.u32 %v1545, 7
        %v1547 = vsub.s32 0, %v1546
        %v1548 = vrot.slane %v1543, %v1547
        %v1566 = vunpack.c.l.b16 %v1527
        %v1567 = vunpack.c.l.b16 %v1528
        %v1568 = vunpack.c.l.b16 %v1529
        %v1569 = vunpack.c.l.b16 %v1530
        %v1570 = vunpack.c.l.b16 %v1531
        %v1571 = vunpack.c.l.b16 %v1532
        %v1572 = vunpack.c.l.b16 %v1533
        %v1573 = vunpack.c.l.b16 %v1534
        %v1574 = vunpack.c.l.b16 %v1535
        %v1575 = vunpack.c.l.b16 %v1536
        %v1576 = vunpack.c.l.b16 %v1537
        %v1577 = vunpack.c.l.b16 %v1538
        %v1578 = vunpack.c.l.b16 %v1539
        %v1579 = vunpack.c.l.b16 %v1540
        %v1580 = vunpack.c.l.b16 %v1541
        %v1581 = vunpack.c.l.b16 %v1542
        %v1582 = vpack.c.b16 %v1567, %v1566
        %v1583 = vpack.c.b16 %v1569, %v1568
        %v1584 = vpack.c.b16 %v1571, %v1570
        %v1585 = vpack.c.b16 %v1573, %v1572
        %v1586 = vpack.c.b16 %v1575, %v1574
        %v1587 = vpack.c.b16 %v1577, %v1576
        %v1588 = vpack.c.b16 %v1579, %v1578
        %v1589 = vpack.c.b16 %v1581, %v1580
        %1598 = vmatprep.subr.bf16.mxu0 0
        %1599 = vmatpush1.bf16.msra.mxu0 %v1589
        %1600 = vmatprep.subr.bf16.mxu0 0
        %1601 = vmatpush1.bf16.msra.mxu0 %v1588
        %1602 = vmatprep.subr.bf16.mxu0 0
        %1603 = vmatpush1.bf16.msra.mxu0 %v1587
        %1604 = vmatprep.subr.bf16.mxu0 0
        %1605 = vmatpush1.bf16.msra.mxu0 %v1586
        %1606 = vmatprep.subr.bf16.mxu0 0
        %1607 = vmatpush1.bf16.msra.mxu0 %v1585
        %1608 = vmatprep.subr.bf16.mxu0 0
        %1609 = vmatpush1.bf16.msra.mxu0 %v1584
        %1610 = vmatprep.subr.bf16.mxu0 0
        %1611 = vmatpush1.bf16.msra.mxu0 %v1583
        %1612 = vmatprep.subr.bf16.mxu0 0
        %1613 = vmatpush1.bf16.msra.mxu0 %v1582
        %1614 = vmatprep.subr.bf16.mxu0 0
        %1615 = vmatpush2.bf16.msra.mxu0 0
        %1616 = vmatprep.subr.bf16.mxu0 0
        %1617 = vmatpush2.bf16.msra.mxu0 0
        %1618 = vmatprep.subr.bf16.mxu0 0
        %1619 = vmatpush2.bf16.msra.mxu0 0
        %1620 = vmatprep.subr.bf16.mxu0 0
        %1621 = vmatpush2.bf16.msra.mxu0 0
        %1622 = vmatprep.subr.bf16.mxu0 0
        %1623 = vmatpush2.bf16.msra.mxu0 0
        %1624 = vmatprep.subr.bf16.mxu0 0
        %1625 = vmatpush2.bf16.msra.mxu0 0
        %1626 = vmatprep.subr.bf16.mxu0 0
        %1627 = vmatpush2.bf16.msra.mxu0 0
        %1628 = vmatprep.subr.bf16.mxu0 0
        %1629 = vmatpush2.bf16.msra.mxu0 0
        %1630 = vmatprep.mubr.bf16.mxu0 0
        %1631 = vmatmul.mubr.bf16.gmra.mxu0 %v1526
        %v1632 = vpop.f32.mrf.mxu0
        %v1633 = vadd.f32 %v1548, %v1632
        %v1634 = vpop.f32.mrf.mxu0
        %v1635 = vpop.f32.mrf.mxu0
        %v1636 = vpop.f32.mrf.mxu0
        %1637 = vdwg.mxu0
        %v1638 = vmax.f32 %v1633, 0.0
        %v1639 = vpack.c.bf16 %v1638, %v1638
        %v1640 = vld [vmem:[%s7] sm:$0xf]
        %v1641 = vld [vmem:[%s7 + $0x4] sm:$0xf]
        %v1642 = vld [vmem:[%s7 + $0x8] sm:$0xf]
        %v1643 = vld [vmem:[%s7 + $0xc] sm:$0xf]
        %v1644 = vld [vmem:[%s7 + $0x10] sm:$0xf]
        %v1645 = vld [vmem:[%s7 + $0x14] sm:$0xf]
        %v1646 = vld [vmem:[%s7 + $0x18] sm:$0xf]
        %v1647 = vld [vmem:[%s7 + $0x1c] sm:$0xf]
        %v1648 = vld [vmem:[#allocation11] sm:$0x1]
        %v1650 = vlaneseq
        %v1651 = vshrl.u32 %v1650, 7
        %v1652 = vsub.s32 0, %v1651
        %v1653 = vrot.slane %v1648, %v1652
        %v1663 = vunpack.c.l.b16 %v1640
        %v1664 = vunpack.c.l.b16 %v1641
        %v1665 = vunpack.c.l.b16 %v1642
        %v1666 = vunpack.c.l.b16 %v1643
        %v1667 = vunpack.c.l.b16 %v1644
        %v1668 = vunpack.c.l.b16 %v1645
        %v1669 = vunpack.c.l.b16 %v1646
        %v1670 = vunpack.c.l.b16 %v1647
        %v1671 = vpack.c.b16 %v1664, %v1663
        %v1672 = vpack.c.b16 %v1666, %v1665
        %v1673 = vpack.c.b16 %v1668, %v1667
        %v1674 = vpack.c.b16 %v1670, %v1669
        %vm1679 = vcmask 523264
        %v1681 = vsel %vm1679, %v1639, 0
        %1683 = vmatprep.subr.bf16.mxu0 0
        %1684 = vmatpush1.bf16.msra.mxu0 0
        %1685 = vmatprep.subr.bf16.mxu0 0
        %1686 = vmatpush1.bf16.msra.mxu0 0
        %1687 = vmatprep.subr.bf16.mxu0 0
        %1688 = vmatpush1.bf16.msra.mxu0 0
        %1689 = vmatprep.subr.bf16.mxu0 0
        %1690 = vmatpush1.bf16.msra.mxu0 0
        %1691 = vmatprep.subr.bf16.mxu0 0
        %1692 = vmatpush1.bf16.msra.mxu0 %v1674
        %1693 = vmatprep.subr.bf16.mxu0 0
        %1694 = vmatpush1.bf16.msra.mxu0 %v1673
        %1695 = vmatprep.subr.bf16.mxu0 0
        %1696 = vmatpush1.bf16.msra.mxu0 %v1672
        %1697 = vmatprep.subr.bf16.mxu0 0
        %1698 = vmatpush1.bf16.msra.mxu0 %v1671
        %1699 = vmatprep.subr.bf16.mxu0 0
        %1700 = vmatpush2.bf16.msra.mxu0 0
        %1701 = vmatprep.subr.bf16.mxu0 0
        %1702 = vmatpush2.bf16.msra.mxu0 0
        %1703 = vmatprep.subr.bf16.mxu0 0
        %1704 = vmatpush2.bf16.msra.mxu0 0
        %1705 = vmatprep.subr.bf16.mxu0 0
        %1706 = vmatpush2.bf16.msra.mxu0 0
        %1707 = vmatprep.subr.bf16.mxu0 0
        %1708 = vmatpush2.bf16.msra.mxu0 0
        %1709 = vmatprep.subr.bf16.mxu0 0
        %1710 = vmatpush2.bf16.msra.mxu0 0
        %1711 = vmatprep.subr.bf16.mxu0 0
        %1712 = vmatpush2.bf16.msra.mxu0 0
        %1713 = vmatprep.subr.bf16.mxu0 0
        %1714 = vmatpush2.bf16.msra.mxu0 0
        %1715 = vmatprep.mubr.bf16.mxu0 0
        %1716 = vmatmul.mubr.bf16.gmra.mxu0 %v1681
        %v1717 = vpop.f32.mrf.mxu0
        %v1718 = vadd.f32 %v1653, %v1717
        %v1719 = vpop.f32.mrf.mxu0
        %v1720 = vpop.f32.mrf.mxu0
        %v1721 = vpop.f32.mrf.mxu0
        %1722 = vdwg.mxu0
        %v1723 = vmax.f32 %v1718, 0.0
        %v1724 = vpack.c.bf16 %v1723, %v1723
        %v1725 = vld [vmem:[%s9] sm:$0xf]
        %v1726 = vld [vmem:[%s9 + $0x4] sm:$0xf]
        %v1727 = vld [vmem:[%s9 + $0x8] sm:$0xf]
        %v1728 = vld [vmem:[%s9 + $0xc] sm:$0xf]
        %v1729 = vld [vmem:[%s10] sm:$0x1]
        %v1731 = vlaneseq
        %v1732 = vshrl.u32 %v1731, 7
        %v1733 = vsub.s32 0, %v1732
        %v1734 = vrot.slane %v1729, %v1733
        %v1740 = vunpack.c.l.b16 %v1725
        %v1741 = vunpack.c.l.b16 %v1726
        %v1742 = vunpack.c.l.b16 %v1727
        %v1743 = vunpack.c.l.b16 %v1728
        %v1744 = vpack.c.b16 %v1741, %v1740
        %v1745 = vpack.c.b16 %v1743, %v1742
        %vm1748 = vcmask 261120
        %v1750 = vsel %vm1748, %v1724, 0
        %1752 = vmatprep.subr.bf16.mxu0 0
        %1753 = vmatpush1.bf16.msra.mxu0 0
        %1754 = vmatprep.subr.bf16.mxu0 0
        %1755 = vmatpush1.bf16.msra.mxu0 0
        %1756 = vmatprep.subr.bf16.mxu0 0
        %1757 = vmatpush1.bf16.msra.mxu0 0
        %1758 = vmatprep.subr.bf16.mxu0 0
        %1759 = vmatpush1.bf16.msra.mxu0 0
        %1760 = vmatprep.subr.bf16.mxu0 0
        %1761 = vmatpush1.bf16.msra.mxu0 0
        %1762 = vmatprep.subr.bf16.mxu0 0
        %1763 = vmatpush1.bf16.msra.mxu0 0
        %1764 = vmatprep.subr.bf16.mxu0 0
        %1765 = vmatpush1.bf16.msra.mxu0 %v1745
        %1766 = vmatprep.subr.bf16.mxu0 0
        %1767 = vmatpush1.bf16.msra.mxu0 %v1744
        %1768 = vmatprep.subr.bf16.mxu0 0
        %1769 = vmatpush2.bf16.msra.mxu0 0
        %1770 = vmatprep.subr.bf16.mxu0 0
        %1771 = vmatpush2.bf16.msra.mxu0 0
        %1772 = vmatprep.subr.bf16.mxu0 0
        %1773 = vmatpush2.bf16.msra.mxu0 0
        %1774 = vmatprep.subr.bf16.mxu0 0
        %1775 = vmatpush2.bf16.msra.mxu0 0
        %1776 = vmatprep.subr.bf16.mxu0 0
        %1777 = vmatpush2.bf16.msra.mxu0 0
        %1778 = vmatprep.subr.bf16.mxu0 0
        %1779 = vmatpush2.bf16.msra.mxu0 0
        %1780 = vmatprep.subr.bf16.mxu0 0
        %1781 = vmatpush2.bf16.msra.mxu0 0
        %1782 = vmatprep.subr.bf16.mxu0 0
        %1783 = vmatpush2.bf16.msra.mxu0 0
        %1784 = vmatprep.mubr.bf16.mxu0 0
        %1785 = vmatmul.mubr.bf16.gmra.mxu0 %v1750
        %v1786 = vpop.f32.mrf.mxu0
        %v1787 = vadd.f32 %v1734, %v1786
        %v1788 = vpop.f32.mrf.mxu0
        %v1789 = vpop.f32.mrf.mxu0
        %v1790 = vpop.f32.mrf.mxu0
        %1791 = vdwg.mxu0
        %vm1792 = vcmask 130048
        %1793 = vst.msk [vmem:[%s467] sm:$0xff] %vm1792, %v1787
        %s1794 = sand.u32 %s275, 1
        %s1795 = scalar_lea.sflag [#allocation4], %s1794
        %s1796 = sand.u32 %s275, 1
        %s1797 = smul.addr %s1796, 8
        %s1798 = scalar_lea.vmem [#allocation13], %s1797
        // Predicated region
        $region89: #{tpu_custom_call.1} parent=63 // pred_check
          %p1799 = pneg %p285
        $region90: #{tpu_custom_call.1} parent=63 // pred_check_branch
          %1801 = sbr.rel (%p1799) target = $region92
        $region91: #{tpu_custom_call.1} parent=63 // pred_region
          %s1803 = ssub.s32 128, 128
          %1804 = vsyncadd %s1795, %s1803
          %s1805 = smul.addr %s31, 128
          %s1806 = scalar_lea.hbm %s11, %s1805
          %s1808 = sshll.u32 %s1798, 4
          %s1809 = int_to_ptr.vmem [resolvable:$true] %s1808
          %1811 = dma.vmem_to_hbm [thread:$0]  %s1809, 128, %s1806, %s1795
        $region92: #{tpu_custom_call.1} parent=63 // pred_fallthru
          _
      $region64: #{tpu_custom_call.1} parent=5 // pred_fallthru
        _
      %p1812 = scmp.le.s32.totalorder 2, %s26
      // Predicated region
      $region93: #{tpu_custom_call.1} parent=5 // pred_check
        %p1813 = pneg %p1812
      $region94: #{tpu_custom_call.1} parent=5 // pred_check_branch
        %1815 = sbr.rel (%p1813) target = $region96
      $region95: #{tpu_custom_call.1} parent=5 // pred_region
        %s1816 = ssub.s32 %s26, 2
        // Predicated region
        $region97: #{tpu_custom_call.1} parent=95 // pred_check
          %p1817 = pneg %p291
        $region98: #{tpu_custom_call.1} parent=95 // pred_check_branch
          %1819 = sbr.rel (%p1817) target = $region100
        $region99: #{tpu_custom_call.1} parent=95 // pred_region
          %s1820 = sand.u32 %s276, 1
          %s1821 = scalar_lea.sflag [#allocation4], %s1820
          %s1822 = sand.u32 %s276, 1
          %s1823 = smul.addr %s1822, 8
          %s1824 = scalar_lea.vmem [#allocation13], %s1823
          %1825 = dma.done %s1821, 128
        $region100: #{tpu_custom_call.1} parent=95 // pred_fallthru
          _
      $region96: #{tpu_custom_call.1} parent=5 // pred_fallthru
        _
    $region6: #{tpu_custom_call.1} parent=1 // loop_footer
      %s30 = sadd.s32 1, %s26
    $region7: #{tpu_custom_call.1} parent=1 // loop_footer_branch
      %25 = sbr.rel target = $region3
    $region8: #{tpu_custom_call.1} parent=1 // loop_exit
      _
    %1826 = vsyncpa [#allocation3], 1
    %s1827 = scalar_lea.sflag [#allocation3], 1
    %1828 = vsyncpa %s1827, 1
    %1829 = vsyncpa [#allocation6], 1
    %1830 = vsyncpa [#allocation9], 1
    %1831 = vsyncpa [#allocation12], 1
    %1832 = vsyncpa [#allocation4], 1
    %s1833 = scalar_lea.sflag [#allocation4], 1
    %1834 = vsyncpa %s1833, 1

</llo_original>
